<compile_context>
chip_gen: v7x
topology: tpu7x:2x2x1
jax: 0.10.0
libtpu: 0.0.40
codegen_flags: <defaults>
</compile_context>

<pallas_src>
import math
import functools

import jax
import jax.numpy as jnp
from jax.experimental import pallas as pl
from jax.experimental.pallas import tpu as pltpu


# ---------------- model hyper-params (small, synthetic) ----------------
B = 2              # batch
C = 4              # image channels
IMG = 16           # spatial
PATCH = 8          # patch size -> 2x2 = 4 patches
NP = (IMG // PATCH) ** 2        # num patches
S = NP + 1                      # +1 CLS token  (= 5)
S_PAD = 8                       # sublane-aligned sequence length
D = 32                          # hidden size
NUM_HEADS = 4
HD = D // NUM_HEADS             # 8
MLP = 64
NUM_LAYERS = 2
CPP = C * PATCH * PATCH         # flattened patch size (256)
LN_EPS = 1e-6
NEG_INF = -1e30


# ---------------------------------------------------------------------------
# in-kernel helpers (f32 elementwise)
# ---------------------------------------------------------------------------
def _gelu_tanh(x):
    c = math.sqrt(2.0 / math.pi)
    return 0.5 * x * (1.0 + jnp.tanh(c * (x + 0.044715 * x * x * x)))


def _layer_norm(x, w, b):
    mu = jnp.mean(x, axis=-1, keepdims=True)
    var = jnp.mean((x - mu) ** 2, axis=-1, keepdims=True)
    return (x - mu) * jax.lax.rsqrt(var + LN_EPS) * w + b


# ---------------------------------------------------------------------------
# Fused kernel: patch-embed + CLS/pos + N encoder layers + feature select
# One grid step == one batch element.
# ---------------------------------------------------------------------------
def _fused_encoder_kernel(xp_ref, pw_ref, tok_ref, wqkv_ref, wo_ref,
                          w1_ref, w2_ref, small_ref, o_ref,
                          *, n_layers, out_start, out_rows):
    # ---- patch embedding; patch bias, CLS token and pos-emb folded into tok_ref
    # (row 0 of xp is zeros -> contributes nothing, CLS+pos comes from tok_ref)
    x = jnp.dot(xp_ref[0].astype(jnp.bfloat16), pw_ref[...],
                preferred_element_type=jnp.float32) + tok_ref[...]   # (S_PAD, D) f32

    # padded key positions (rows S..S_PAD-1) must not attend
    key_ok = jax.lax.broadcasted_iota(jnp.int32, (S_PAD, S_PAD), 1) < S

    for l in range(n_layers):                       # static unroll, only needed layers
        sp = small_ref[l]                           # (8, 128) packed small params
        ln1_w, ln1_b = sp[0:1, :D], sp[1:2, :D]
        bqkv = sp[2:3, :3 * D]
        bo = sp[3:4, :D]
        ln2_w, ln2_b = sp[4:5, :D], sp[5:6, :D]
        b1 = sp[6:7, :MLP]
        b2 = sp[7:8, :D]

        # ---- multi-head self-attention (fused QKV; 1/sqrt(HD) folded into Wq) ----
        h = _layer_norm(x, ln1_w, ln1_b)
        qkv = jnp.dot(h.astype(jnp.bfloat16), wqkv_ref[l],
                      preferred_element_type=jnp.float32) + bqkv     # (S_PAD, 3D)
        qkv_b = qkv.astype(jnp.bfloat16)
        wo_l = wo_ref[l]                                             # (D, D) bf16

        attn = jnp.zeros((S_PAD, D), jnp.float32)
        for hh in range(NUM_HEADS):
            qs = qkv_b[:, hh * HD:(hh + 1) * HD]
            ks = qkv_b[:, D + hh * HD:D + (hh + 1) * HD]
            vs = qkv_b[:, 2 * D + hh * HD:2 * D + (hh + 1) * HD]
            # contract the head dim directly: no explicit ks.T (no XLU transpose)
            s = jax.lax.dot_general(qs, ks, (((1,), (1,)), ((), ())),
                                    preferred_element_type=jnp.float32)   # (S_PAD, S_PAD)
            s = jnp.where(key_ok, s, NEG_INF)
            s = s - jnp.max(s, axis=-1, keepdims=True)
            p = jnp.exp(s)
            p = p * pl.reciprocal(jnp.sum(p, axis=-1, keepdims=True), approx=True)
            ho = jnp.dot(p.astype(jnp.bfloat16), vs,
                         preferred_element_type=jnp.float32)              # (S_PAD, HD)
            # accumulate this head's slice of the output projection (no concatenate)
            attn = attn + jnp.dot(ho.astype(jnp.bfloat16),
                                  wo_l[hh * HD:(hh + 1) * HD, :],
                                  preferred_element_type=jnp.float32)
        x = x + attn + bo

        # ---- MLP ----
        h2 = _layer_norm(x, ln2_w, ln2_b)
        f = jnp.dot(h2.astype(jnp.bfloat16), w1_ref[l],
                    preferred_element_type=jnp.float32) + b1
        f = _gelu_tanh(f)                                            # TODO(synk): tanh approx (PyTorch default GELU is erf)
        f = jnp.dot(f.astype(jnp.bfloat16), w2_ref[l],
                    preferred_element_type=jnp.float32) + b2
        x = x + f

    # feature select: 'patch' drops the CLS row; padded rows never stored
    o_ref[0] = x[out_start:out_start + out_rows]


# ---------------------------------------------------------------------------
# Parameter init (deterministic, synthetic) -- already packed for the kernel
# ---------------------------------------------------------------------------
def init_params(key):
    def nrm(k, shape, scale=0.02):
        return (scale * jax.random.normal(k, shape)).astype(jnp.float32)

    keys = jax.random.split(key, 3 + NUM_LAYERS)
    patch_w = nrm(keys[0], (CPP, D))
    cls = nrm(keys[1], (1, D))
    pos = nrm(keys[2], (S, D))
    patch_b = jnp.zeros((D,), jnp.float32)

    # fold patch bias + CLS token + positional embedding into one additive map
    tok_add = jnp.zeros((S_PAD, D), jnp.float32)
    tok_add = tok_add.at[0].set(cls[0] + pos[0])
    tok_add = tok_add.at[1:S].set(pos[1:] + patch_b[None, :])

    wqkv_l, wo_l, w1_l, w2_l, small_l = [], [], [], [], []
    for li in range(NUM_LAYERS):
        lk = jax.random.split(keys[3 + li], 6)
        wq = nrm(lk[0], (D, D)) * (1.0 / math.sqrt(HD))   # attention scale folded into Wq
        wk = nrm(lk[1], (D, D))
        wv = nrm(lk[2], (D, D))
        wo = nrm(lk[3], (D, D))
        w1 = nrm(lk[4], (D, MLP))
        w2 = nrm(lk[5], (MLP, D))

        # pack all small per-layer params into one (8, 128) f32 tile
        sp = jnp.zeros((8, 128), jnp.float32)
        sp = sp.at[0, :D].set(jnp.ones((D,), jnp.float32))       # ln1_w
        sp = sp.at[1, :D].set(jnp.zeros((D,), jnp.float32))      # ln1_b
        sp = sp.at[2, :3 * D].set(jnp.zeros((3 * D,), jnp.float32))  # bqkv
        sp = sp.at[3, :D].set(jnp.zeros((D,), jnp.float32))      # bo
        sp = sp.at[4, :D].set(jnp.ones((D,), jnp.float32))       # ln2_w
        sp = sp.at[5, :D].set(jnp.zeros((D,), jnp.float32))      # ln2_b
        sp = sp.at[6, :MLP].set(jnp.zeros((MLP,), jnp.float32))  # b1
        sp = sp.at[7, :D].set(jnp.zeros((D,), jnp.float32))      # b2

        wqkv_l.append(jnp.concatenate([wq, wk, wv], axis=1))
        wo_l.append(wo)
        w1_l.append(w1)
        w2_l.append(w2)
        small_l.append(sp)

    return {
        "patch_w": patch_w.astype(jnp.bfloat16),
        "tok_add": tok_add,
        "wqkv": jnp.stack(wqkv_l).astype(jnp.bfloat16),   # (L, D, 3D)
        "wo": jnp.stack(wo_l).astype(jnp.bfloat16),       # (L, D, D)
        "w1": jnp.stack(w1_l).astype(jnp.bfloat16),       # (L, D, MLP)
        "w2": jnp.stack(w2_l).astype(jnp.bfloat16),       # (L, MLP, D)
        "small": jnp.stack(small_l),                      # (L, 8, 128) f32
    }


# ---------------------------------------------------------------------------
# EncoderModel.forward equivalent (single fused pallas_call)
# ---------------------------------------------------------------------------
@functools.partial(jax.jit, static_argnames=("select_layer", "select_feature"))
def encoder_forward(params, x_nchw, *, select_layer, select_feature):
    b, c, hgt, wid = x_nchw.shape
    gh, gw = hgt // PATCH, wid // PATCH

    # im2col patch extraction (tiny plain-JAX glue, fused by XLA into this jit)
    xp = x_nchw.reshape(b, c, gh, PATCH, gw, PATCH)
    xp = xp.transpose(0, 2, 4, 1, 3, 5).reshape(b, gh * gw, c * PATCH * PATCH)
    xp = xp.astype(jnp.float32)
    # row 0 reserved for CLS (zeros -> matmul contributes nothing); pad seq to S_PAD
    xp_pad = jnp.pad(xp, ((0, 0), (1, S_PAD - 1 - NP), (0, 0)))   # (B, S_PAD, CPP)

    # hidden_states[i] == output after running i layers (index 0 = embeddings)
    n_layers = select_layer % (NUM_LAYERS + 1)
    lp = max(n_layers, 1)            # keep non-empty weight stacks even if 0 layers run

    if select_feature == "patch":
        out_start, out_rows = 1, NP          # drop CLS token
    else:                                    # 'cls_patch' or default: keep everything
        out_start, out_rows = 0, S

    kernel = functools.partial(_fused_encoder_kernel, n_layers=n_layers,
                               out_start=out_start, out_rows=out_rows)

    return pl.pallas_call(
        kernel,
        out_shape=jax.ShapeDtypeStruct((b, out_rows, D), jnp.float32),
        grid=(b,),
        in_specs=[
            pl.BlockSpec((1, S_PAD, CPP), lambda i: (i, 0, 0)),      # patches (per batch)
            pl.BlockSpec((CPP, D), lambda i: (0, 0)),                # patch-embed weight
            pl.BlockSpec((S_PAD, D), lambda i: (0, 0)),              # folded cls/pos/bias
            pl.BlockSpec((lp, D, 3 * D), lambda i: (0, 0, 0)),       # fused QKV weights
            pl.BlockSpec((lp, D, D), lambda i: (0, 0, 0)),           # out-proj weights
            pl.BlockSpec((lp, D, MLP), lambda i: (0, 0, 0)),         # fc1
            pl.BlockSpec((lp, MLP, D), lambda i: (0, 0, 0)),         # fc2
            pl.BlockSpec((lp, 8, 128), lambda i: (0, 0, 0)),         # packed small params
        ],
        out_specs=pl.BlockSpec((1, out_rows, D), lambda i: (i, 0, 0)),
        compiler_params=pltpu.CompilerParams(
            dimension_semantics=("parallel",)),                      # v7x: 1 batch / core
    )(xp_pad, params["patch_w"], params["tok_add"],
      params["wqkv"][:lp], params["wo"][:lp],
      params["w1"][:lp], params["w2"][:lp], params["small"][:lp])


# ---------------------------------------------------------------------------
if __name__ == "__main__":
    key = jax.random.PRNGKey(0)
    pkey, xkey = jax.random.split(key)
    params = init_params(pkey)

    x = jax.random.normal(xkey, (B, C, IMG, IMG), dtype=jnp.float32)

    select_layer = -2          # typical LLaVA-style choice -> only layer 0 runs
    select_feature = "patch"   # drop CLS token

    feats = encoder_forward(params, x, select_layer=select_layer,
                            select_feature=select_feature)
    feats = jax.block_until_ready(feats)

    assert feats.shape == (B, NP, D), feats.shape
    assert bool(jnp.all(jnp.isfinite(feats)))
    print("KERNEL_OK")
</pallas_src>

<mosaic_0001>
module attributes {stable_mosaic.version = 11 : i64} {
  func.func @_fused_encoder_kernel(%arg0: i32, %arg1: memref<1x8x256xf32, #tpu.memory_space<vmem>>, %arg2: memref<256x32xbf16, #tpu.memory_space<vmem>>, %arg3: memref<8x32xf32, #tpu.memory_space<vmem>>, %arg4: memref<1x32x96xbf16, #tpu.memory_space<vmem>>, %arg5: memref<1x32x32xbf16, #tpu.memory_space<vmem>>, %arg6: memref<1x32x64xbf16, #tpu.memory_space<vmem>>, %arg7: memref<1x64x32xbf16, #tpu.memory_space<vmem>>, %arg8: memref<1x8x128xf32, #tpu.memory_space<vmem>>, %arg9: memref<1x4x32xf32, #tpu.memory_space<vmem>>) attributes {dimension_semantics = [#tpu.dimension_semantics<parallel>], iteration_bounds = array<i64: 2>, scalar_prefetch = 0 : i64, scratch_operands = 0 : i64, tpu.core_type = #tpu.core_type<tc>, window_params = [{transform_indices = @transform_0, window_bounds = array<i64: 1, 8, 256>}, {pipeline_mode = #tpu.pipeline_mode<synchronous>, transform_indices = @transform_1, window_bounds = array<i64: 256, 32>}, {pipeline_mode = #tpu.pipeline_mode<synchronous>, transform_indices = @transform_2, window_bounds = array<i64: 8, 32>}, {pipeline_mode = #tpu.pipeline_mode<synchronous>, transform_indices = @transform_3, window_bounds = array<i64: 1, 32, 96>}, {pipeline_mode = #tpu.pipeline_mode<synchronous>, transform_indices = @transform_4, window_bounds = array<i64: 1, 32, 32>}, {pipeline_mode = #tpu.pipeline_mode<synchronous>, transform_indices = @transform_5, window_bounds = array<i64: 1, 32, 64>}, {pipeline_mode = #tpu.pipeline_mode<synchronous>, transform_indices = @transform_6, window_bounds = array<i64: 1, 64, 32>}, {pipeline_mode = #tpu.pipeline_mode<synchronous>, transform_indices = @transform_7, window_bounds = array<i64: 1, 8, 128>}, {transform_indices = @transform_8, window_bounds = array<i64: 1, 4, 32>}]} {
    %c0 = arith.constant 0 : index
    %c0_0 = arith.constant 0 : index
    %c0_1 = arith.constant 0 : index
    %0 = vector.load %arg1[%c0, %c0_0, %c0_1] : memref<1x8x256xf32, #tpu.memory_space<vmem>>, vector<1x8x256xf32>
    %1 = vector.shape_cast %0 : vector<1x8x256xf32> to vector<8x256xf32>
    %2 = arith.truncf %1 : vector<8x256xf32> to vector<8x256xbf16>
    %c0_2 = arith.constant 0 : index
    %c0_3 = arith.constant 0 : index
    %3 = vector.load %arg2[%c0_2, %c0_3] : memref<256x32xbf16, #tpu.memory_space<vmem>>, vector<256x32xbf16>
    %cst = arith.constant dense<0.000000e+00> : vector<8x32xf32>
    %4 = tpu.matmul %2, %3, %cst {dimension_numbers = #tpu.dot_dimension_numbers<[1], [0], [0], [1], [0, 0, 1, 1], [], []>} : vector<8x256xbf16>, vector<256x32xbf16>, vector<8x32xf32> -> vector<8x32xf32>
    %c0_4 = arith.constant 0 : index
    %c0_5 = arith.constant 0 : index
    %5 = vector.load %arg3[%c0_4, %c0_5] : memref<8x32xf32, #tpu.memory_space<vmem>>, vector<8x32xf32>
    %6 = arith.addf %4, %5 : vector<8x32xf32>
    %7 = tpu.iota {dimensions = array<i32: 1>} : vector<8x8xi32>
    %c5_i32 = arith.constant 5 : i32
    %8 = vector.broadcast %c5_i32 : i32 to vector<8x8xi32>
    %9 = arith.cmpi slt, %7, %8 : vector<8x8xi32>
    %c0_6 = arith.constant 0 : index
    %c0_7 = arith.constant 0 : index
    %c0_8 = arith.constant 0 : index
    %10 = vector.load %arg8[%c0_6, %c0_7, %c0_8] : memref<1x8x128xf32, #tpu.memory_space<vmem>>, vector<1x8x128xf32>
    %11 = vector.shape_cast %10 : vector<1x8x128xf32> to vector<8x128xf32>
    %12 = vector.extract_strided_slice %11 {offsets = [0, 0], sizes = [1, 32], strides = [1, 1]} : vector<8x128xf32> to vector<1x32xf32>
    %13 = vector.extract_strided_slice %11 {offsets = [1, 0], sizes = [1, 32], strides = [1, 1]} : vector<8x128xf32> to vector<1x32xf32>
    %14 = vector.extract_strided_slice %11 {offsets = [2, 0], sizes = [1, 96], strides = [1, 1]} : vector<8x128xf32> to vector<1x96xf32>
    %15 = vector.extract_strided_slice %11 {offsets = [3, 0], sizes = [1, 32], strides = [1, 1]} : vector<8x128xf32> to vector<1x32xf32>
    %16 = vector.extract_strided_slice %11 {offsets = [4, 0], sizes = [1, 32], strides = [1, 1]} : vector<8x128xf32> to vector<1x32xf32>
    %17 = vector.extract_strided_slice %11 {offsets = [5, 0], sizes = [1, 32], strides = [1, 1]} : vector<8x128xf32> to vector<1x32xf32>
    %18 = vector.extract_strided_slice %11 {offsets = [6, 0], sizes = [1, 64], strides = [1, 1]} : vector<8x128xf32> to vector<1x64xf32>
    %19 = vector.extract_strided_slice %11 {offsets = [7, 0], sizes = [1, 32], strides = [1, 1]} : vector<8x128xf32> to vector<1x32xf32>
    %cst_9 = arith.constant dense<0.000000e+00> : vector<8xf32>
    %20 = vector.multi_reduction <add>, %6, %cst_9 [1] : vector<8x32xf32> to vector<8xf32>
    %21 = vector.shape_cast %20 : vector<8xf32> to vector<8x1xf32>
    %cst_10 = arith.constant 3.200000e+01 : f32
    %22 = vector.broadcast %cst_10 : f32 to vector<8x1xf32>
    %23 = arith.divf %21, %22 : vector<8x1xf32>
    %24 = vector.broadcast %23 : vector<8x1xf32> to vector<8x32xf32>
    %25 = arith.subf %6, %24 : vector<8x32xf32>
    %26 = arith.mulf %25, %25 : vector<8x32xf32>
    %cst_11 = arith.constant dense<0.000000e+00> : vector<8xf32>
    %27 = vector.multi_reduction <add>, %26, %cst_11 [1] : vector<8x32xf32> to vector<8xf32>
    %28 = vector.shape_cast %27 : vector<8xf32> to vector<8x1xf32>
    %cst_12 = arith.constant 3.200000e+01 : f32
    %29 = vector.broadcast %cst_12 : f32 to vector<8x1xf32>
    %30 = arith.divf %28, %29 : vector<8x1xf32>
    %31 = vector.broadcast %23 : vector<8x1xf32> to vector<8x32xf32>
    %32 = arith.subf %6, %31 : vector<8x32xf32>
    %cst_13 = arith.constant 9.99999997E-7 : f32
    %33 = vector.broadcast %cst_13 : f32 to vector<8x1xf32>
    %34 = arith.addf %30, %33 : vector<8x1xf32>
    %35 = math.rsqrt %34 : vector<8x1xf32>
    %36 = vector.broadcast %35 : vector<8x1xf32> to vector<8x32xf32>
    %37 = arith.mulf %32, %36 : vector<8x32xf32>
    %38 = vector.broadcast %12 : vector<1x32xf32> to vector<8x32xf32>
    %39 = arith.mulf %37, %38 : vector<8x32xf32>
    %40 = vector.broadcast %13 : vector<1x32xf32> to vector<8x32xf32>
    %41 = arith.addf %39, %40 : vector<8x32xf32>
    %42 = arith.truncf %41 : vector<8x32xf32> to vector<8x32xbf16>
    %c0_14 = arith.constant 0 : index
    %c0_15 = arith.constant 0 : index
    %c0_16 = arith.constant 0 : index
    %43 = vector.load %arg4[%c0_14, %c0_15, %c0_16] : memref<1x32x96xbf16, #tpu.memory_space<vmem>>, vector<1x32x96xbf16>
    %44 = vector.shape_cast %43 : vector<1x32x96xbf16> to vector<32x96xbf16>
    %cst_17 = arith.constant dense<0.000000e+00> : vector<8x96xf32>
    %45 = tpu.matmul %42, %44, %cst_17 {dimension_numbers = #tpu.dot_dimension_numbers<[1], [0], [0], [1], [0, 0, 1, 1], [], []>} : vector<8x32xbf16>, vector<32x96xbf16>, vector<8x96xf32> -> vector<8x96xf32>
    %46 = vector.broadcast %14 : vector<1x96xf32> to vector<8x96xf32>
    %47 = arith.addf %45, %46 : vector<8x96xf32>
    %48 = arith.truncf %47 : vector<8x96xf32> to vector<8x96xbf16>
    %c0_18 = arith.constant 0 : index
    %c0_19 = arith.constant 0 : index
    %c0_20 = arith.constant 0 : index
    %49 = vector.load %arg5[%c0_18, %c0_19, %c0_20] : memref<1x32x32xbf16, #tpu.memory_space<vmem>>, vector<1x32x32xbf16>
    %50 = vector.shape_cast %49 : vector<1x32x32xbf16> to vector<32x32xbf16>
    %cst_21 = arith.constant 0.000000e+00 : f32
    %51 = vector.broadcast %cst_21 : f32 to vector<8x32xf32>
    %52 = vector.extract_strided_slice %48 {offsets = [0, 0], sizes = [8, 8], strides = [1, 1]} : vector<8x96xbf16> to vector<8x8xbf16>
    %53 = vector.extract_strided_slice %48 {offsets = [0, 32], sizes = [8, 8], strides = [1, 1]} : vector<8x96xbf16> to vector<8x8xbf16>
    %54 = vector.extract_strided_slice %48 {offsets = [0, 64], sizes = [8, 8], strides = [1, 1]} : vector<8x96xbf16> to vector<8x8xbf16>
    %cst_22 = arith.constant dense<0.000000e+00> : vector<8x8xf32>
    %55 = tpu.matmul %52, %53, %cst_22 {dimension_numbers = #tpu.dot_dimension_numbers<[1], [1], [0], [0], [0, 0, 1, 0], [], []>} : vector<8x8xbf16>, vector<8x8xbf16>, vector<8x8xf32> -> vector<8x8xf32>
    %cst_23 = arith.constant -1.000000e+30 : f32
    %56 = vector.broadcast %cst_23 : f32 to vector<8x8xf32>
    %57 = arith.select %9, %55, %56 : vector<8x8xi1>, vector<8x8xf32>
    %cst_24 = arith.constant dense<0xFF800000> : vector<8xf32>
    %58 = vector.multi_reduction <maximumf>, %57, %cst_24 [1] : vector<8x8xf32> to vector<8xf32>
    %59 = vector.shape_cast %58 : vector<8xf32> to vector<8x1xf32>
    %60 = vector.broadcast %59 : vector<8x1xf32> to vector<8x8xf32>
    %61 = arith.subf %57, %60 : vector<8x8xf32>
    %62 = math.exp %61 : vector<8x8xf32>
    %cst_25 = arith.constant dense<0.000000e+00> : vector<8xf32>
    %63 = vector.multi_reduction <add>, %62, %cst_25 [1] : vector<8x8xf32> to vector<8xf32>
    %64 = vector.shape_cast %63 : vector<8xf32> to vector<8x1xf32>
    %65 = tpu.reciprocal %64 {approx = true} : vector<8x1xf32> -> vector<8x1xf32>
    %66 = vector.broadcast %65 : vector<8x1xf32> to vector<8x8xf32>
    %67 = arith.mulf %62, %66 : vector<8x8xf32>
    %68 = arith.truncf %67 : vector<8x8xf32> to vector<8x8xbf16>
    %cst_26 = arith.constant dense<0.000000e+00> : vector<8x8xf32>
    %69 = tpu.matmul %68, %54, %cst_26 {dimension_numbers = #tpu.dot_dimension_numbers<[1], [0], [0], [1], [0, 0, 1, 1], [], []>} : vector<8x8xbf16>, vector<8x8xbf16>, vector<8x8xf32> -> vector<8x8xf32>
    %70 = arith.truncf %69 : vector<8x8xf32> to vector<8x8xbf16>
    %71 = vector.extract_strided_slice %50 {offsets = [0, 0], sizes = [8, 32], strides = [1, 1]} : vector<32x32xbf16> to vector<8x32xbf16>
    %cst_27 = arith.constant dense<0.000000e+00> : vector<8x32xf32>
    %72 = tpu.matmul %70, %71, %cst_27 {dimension_numbers = #tpu.dot_dimension_numbers<[1], [0], [0], [1], [0, 0, 1, 1], [], []>} : vector<8x8xbf16>, vector<8x32xbf16>, vector<8x32xf32> -> vector<8x32xf32>
    %73 = arith.addf %51, %72 : vector<8x32xf32>
    %74 = vector.extract_strided_slice %48 {offsets = [0, 8], sizes = [8, 8], strides = [1, 1]} : vector<8x96xbf16> to vector<8x8xbf16>
    %75 = vector.extract_strided_slice %48 {offsets = [0, 40], sizes = [8, 8], strides = [1, 1]} : vector<8x96xbf16> to vector<8x8xbf16>
    %76 = vector.extract_strided_slice %48 {offsets = [0, 72], sizes = [8, 8], strides = [1, 1]} : vector<8x96xbf16> to vector<8x8xbf16>
    %cst_28 = arith.constant dense<0.000000e+00> : vector<8x8xf32>
    %77 = tpu.matmul %74, %75, %cst_28 {dimension_numbers = #tpu.dot_dimension_numbers<[1], [1], [0], [0], [0, 0, 1, 0], [], []>} : vector<8x8xbf16>, vector<8x8xbf16>, vector<8x8xf32> -> vector<8x8xf32>
    %cst_29 = arith.constant -1.000000e+30 : f32
    %78 = vector.broadcast %cst_29 : f32 to vector<8x8xf32>
    %79 = arith.select %9, %77, %78 : vector<8x8xi1>, vector<8x8xf32>
    %cst_30 = arith.constant dense<0xFF800000> : vector<8xf32>
    %80 = vector.multi_reduction <maximumf>, %79, %cst_30 [1] : vector<8x8xf32> to vector<8xf32>
    %81 = vector.shape_cast %80 : vector<8xf32> to vector<8x1xf32>
    %82 = vector.broadcast %81 : vector<8x1xf32> to vector<8x8xf32>
    %83 = arith.subf %79, %82 : vector<8x8xf32>
    %84 = math.exp %83 : vector<8x8xf32>
    %cst_31 = arith.constant dense<0.000000e+00> : vector<8xf32>
    %85 = vector.multi_reduction <add>, %84, %cst_31 [1] : vector<8x8xf32> to vector<8xf32>
    %86 = vector.shape_cast %85 : vector<8xf32> to vector<8x1xf32>
    %87 = tpu.reciprocal %86 {approx = true} : vector<8x1xf32> -> vector<8x1xf32>
    %88 = vector.broadcast %87 : vector<8x1xf32> to vector<8x8xf32>
    %89 = arith.mulf %84, %88 : vector<8x8xf32>
    %90 = arith.truncf %89 : vector<8x8xf32> to vector<8x8xbf16>
    %cst_32 = arith.constant dense<0.000000e+00> : vector<8x8xf32>
    %91 = tpu.matmul %90, %76, %cst_32 {dimension_numbers = #tpu.dot_dimension_numbers<[1], [0], [0], [1], [0, 0, 1, 1], [], []>} : vector<8x8xbf16>, vector<8x8xbf16>, vector<8x8xf32> -> vector<8x8xf32>
    %92 = arith.truncf %91 : vector<8x8xf32> to vector<8x8xbf16>
    %93 = vector.extract_strided_slice %50 {offsets = [8, 0], sizes = [8, 32], strides = [1, 1]} : vector<32x32xbf16> to vector<8x32xbf16>
    %cst_33 = arith.constant dense<0.000000e+00> : vector<8x32xf32>
    %94 = tpu.matmul %92, %93, %cst_33 {dimension_numbers = #tpu.dot_dimension_numbers<[1], [0], [0], [1], [0, 0, 1, 1], [], []>} : vector<8x8xbf16>, vector<8x32xbf16>, vector<8x32xf32> -> vector<8x32xf32>
    %95 = arith.addf %73, %94 : vector<8x32xf32>
    %96 = vector.extract_strided_slice %48 {offsets = [0, 16], sizes = [8, 8], strides = [1, 1]} : vector<8x96xbf16> to vector<8x8xbf16>
    %97 = vector.extract_strided_slice %48 {offsets = [0, 48], sizes = [8, 8], strides = [1, 1]} : vector<8x96xbf16> to vector<8x8xbf16>
    %98 = vector.extract_strided_slice %48 {offsets = [0, 80], sizes = [8, 8], strides = [1, 1]} : vector<8x96xbf16> to vector<8x8xbf16>
    %cst_34 = arith.constant dense<0.000000e+00> : vector<8x8xf32>
    %99 = tpu.matmul %96, %97, %cst_34 {dimension_numbers = #tpu.dot_dimension_numbers<[1], [1], [0], [0], [0, 0, 1, 0], [], []>} : vector<8x8xbf16>, vector<8x8xbf16>, vector<8x8xf32> -> vector<8x8xf32>
    %cst_35 = arith.constant -1.000000e+30 : f32
    %100 = vector.broadcast %cst_35 : f32 to vector<8x8xf32>
    %101 = arith.select %9, %99, %100 : vector<8x8xi1>, vector<8x8xf32>
    %cst_36 = arith.constant dense<0xFF800000> : vector<8xf32>
    %102 = vector.multi_reduction <maximumf>, %101, %cst_36 [1] : vector<8x8xf32> to vector<8xf32>
    %103 = vector.shape_cast %102 : vector<8xf32> to vector<8x1xf32>
    %104 = vector.broadcast %103 : vector<8x1xf32> to vector<8x8xf32>
    %105 = arith.subf %101, %104 : vector<8x8xf32>
    %106 = math.exp %105 : vector<8x8xf32>
    %cst_37 = arith.constant dense<0.000000e+00> : vector<8xf32>
    %107 = vector.multi_reduction <add>, %106, %cst_37 [1] : vector<8x8xf32> to vector<8xf32>
    %108 = vector.shape_cast %107 : vector<8xf32> to vector<8x1xf32>
    %109 = tpu.reciprocal %108 {approx = true} : vector<8x1xf32> -> vector<8x1xf32>
    %110 = vector.broadcast %109 : vector<8x1xf32> to vector<8x8xf32>
    %111 = arith.mulf %106, %110 : vector<8x8xf32>
    %112 = arith.truncf %111 : vector<8x8xf32> to vector<8x8xbf16>
    %cst_38 = arith.constant dense<0.000000e+00> : vector<8x8xf32>
    %113 = tpu.matmul %112, %98, %cst_38 {dimension_numbers = #tpu.dot_dimension_numbers<[1], [0], [0], [1], [0, 0, 1, 1], [], []>} : vector<8x8xbf16>, vector<8x8xbf16>, vector<8x8xf32> -> vector<8x8xf32>
    %114 = arith.truncf %113 : vector<8x8xf32> to vector<8x8xbf16>
    %115 = vector.extract_strided_slice %50 {offsets = [16, 0], sizes = [8, 32], strides = [1, 1]} : vector<32x32xbf16> to vector<8x32xbf16>
    %cst_39 = arith.constant dense<0.000000e+00> : vector<8x32xf32>
    %116 = tpu.matmul %114, %115, %cst_39 {dimension_numbers = #tpu.dot_dimension_numbers<[1], [0], [0], [1], [0, 0, 1, 1], [], []>} : vector<8x8xbf16>, vector<8x32xbf16>, vector<8x32xf32> -> vector<8x32xf32>
    %117 = arith.addf %95, %116 : vector<8x32xf32>
    %118 = vector.extract_strided_slice %48 {offsets = [0, 24], sizes = [8, 8], strides = [1, 1]} : vector<8x96xbf16> to vector<8x8xbf16>
    %119 = vector.extract_strided_slice %48 {offsets = [0, 56], sizes = [8, 8], strides = [1, 1]} : vector<8x96xbf16> to vector<8x8xbf16>
    %120 = vector.extract_strided_slice %48 {offsets = [0, 88], sizes = [8, 8], strides = [1, 1]} : vector<8x96xbf16> to vector<8x8xbf16>
    %cst_40 = arith.constant dense<0.000000e+00> : vector<8x8xf32>
    %121 = tpu.matmul %118, %119, %cst_40 {dimension_numbers = #tpu.dot_dimension_numbers<[1], [1], [0], [0], [0, 0, 1, 0], [], []>} : vector<8x8xbf16>, vector<8x8xbf16>, vector<8x8xf32> -> vector<8x8xf32>
    %cst_41 = arith.constant -1.000000e+30 : f32
    %122 = vector.broadcast %cst_41 : f32 to vector<8x8xf32>
    %123 = arith.select %9, %121, %122 : vector<8x8xi1>, vector<8x8xf32>
    %cst_42 = arith.constant dense<0xFF800000> : vector<8xf32>
    %124 = vector.multi_reduction <maximumf>, %123, %cst_42 [1] : vector<8x8xf32> to vector<8xf32>
    %125 = vector.shape_cast %124 : vector<8xf32> to vector<8x1xf32>
    %126 = vector.broadcast %125 : vector<8x1xf32> to vector<8x8xf32>
    %127 = arith.subf %123, %126 : vector<8x8xf32>
    %128 = math.exp %127 : vector<8x8xf32>
    %cst_43 = arith.constant dense<0.000000e+00> : vector<8xf32>
    %129 = vector.multi_reduction <add>, %128, %cst_43 [1] : vector<8x8xf32> to vector<8xf32>
    %130 = vector.shape_cast %129 : vector<8xf32> to vector<8x1xf32>
    %131 = tpu.reciprocal %130 {approx = true} : vector<8x1xf32> -> vector<8x1xf32>
    %132 = vector.broadcast %131 : vector<8x1xf32> to vector<8x8xf32>
    %133 = arith.mulf %128, %132 : vector<8x8xf32>
    %134 = arith.truncf %133 : vector<8x8xf32> to vector<8x8xbf16>
    %cst_44 = arith.constant dense<0.000000e+00> : vector<8x8xf32>
    %135 = tpu.matmul %134, %120, %cst_44 {dimension_numbers = #tpu.dot_dimension_numbers<[1], [0], [0], [1], [0, 0, 1, 1], [], []>} : vector<8x8xbf16>, vector<8x8xbf16>, vector<8x8xf32> -> vector<8x8xf32>
    %136 = arith.truncf %135 : vector<8x8xf32> to vector<8x8xbf16>
    %137 = vector.extract_strided_slice %50 {offsets = [24, 0], sizes = [8, 32], strides = [1, 1]} : vector<32x32xbf16> to vector<8x32xbf16>
    %cst_45 = arith.constant dense<0.000000e+00> : vector<8x32xf32>
    %138 = tpu.matmul %136, %137, %cst_45 {dimension_numbers = #tpu.dot_dimension_numbers<[1], [0], [0], [1], [0, 0, 1, 1], [], []>} : vector<8x8xbf16>, vector<8x32xbf16>, vector<8x32xf32> -> vector<8x32xf32>
    %139 = arith.addf %117, %138 : vector<8x32xf32>
    %140 = arith.addf %6, %139 : vector<8x32xf32>
    %141 = vector.broadcast %15 : vector<1x32xf32> to vector<8x32xf32>
    %142 = arith.addf %140, %141 : vector<8x32xf32>
    %cst_46 = arith.constant dense<0.000000e+00> : vector<8xf32>
    %143 = vector.multi_reduction <add>, %142, %cst_46 [1] : vector<8x32xf32> to vector<8xf32>
    %144 = vector.shape_cast %143 : vector<8xf32> to vector<8x1xf32>
    %cst_47 = arith.constant 3.200000e+01 : f32
    %145 = vector.broadcast %cst_47 : f32 to vector<8x1xf32>
    %146 = arith.divf %144, %145 : vector<8x1xf32>
    %147 = vector.broadcast %146 : vector<8x1xf32> to vector<8x32xf32>
    %148 = arith.subf %142, %147 : vector<8x32xf32>
    %149 = arith.mulf %148, %148 : vector<8x32xf32>
    %cst_48 = arith.constant dense<0.000000e+00> : vector<8xf32>
    %150 = vector.multi_reduction <add>, %149, %cst_48 [1] : vector<8x32xf32> to vector<8xf32>
    %151 = vector.shape_cast %150 : vector<8xf32> to vector<8x1xf32>
    %cst_49 = arith.constant 3.200000e+01 : f32
    %152 = vector.broadcast %cst_49 : f32 to vector<8x1xf32>
    %153 = arith.divf %151, %152 : vector<8x1xf32>
    %154 = vector.broadcast %146 : vector<8x1xf32> to vector<8x32xf32>
    %155 = arith.subf %142, %154 : vector<8x32xf32>
    %cst_50 = arith.constant 9.99999997E-7 : f32
    %156 = vector.broadcast %cst_50 : f32 to vector<8x1xf32>
    %157 = arith.addf %153, %156 : vector<8x1xf32>
    %158 = math.rsqrt %157 : vector<8x1xf32>
    %159 = vector.broadcast %158 : vector<8x1xf32> to vector<8x32xf32>
    %160 = arith.mulf %155, %159 : vector<8x32xf32>
    %161 = vector.broadcast %16 : vector<1x32xf32> to vector<8x32xf32>
    %162 = arith.mulf %160, %161 : vector<8x32xf32>
    %163 = vector.broadcast %17 : vector<1x32xf32> to vector<8x32xf32>
    %164 = arith.addf %162, %163 : vector<8x32xf32>
    %165 = arith.truncf %164 : vector<8x32xf32> to vector<8x32xbf16>
    %c0_51 = arith.constant 0 : index
    %c0_52 = arith.constant 0 : index
    %c0_53 = arith.constant 0 : index
    %166 = vector.load %arg6[%c0_51, %c0_52, %c0_53] : memref<1x32x64xbf16, #tpu.memory_space<vmem>>, vector<1x32x64xbf16>
    %167 = vector.shape_cast %166 : vector<1x32x64xbf16> to vector<32x64xbf16>
    %cst_54 = arith.constant dense<0.000000e+00> : vector<8x64xf32>
    %168 = tpu.matmul %165, %167, %cst_54 {dimension_numbers = #tpu.dot_dimension_numbers<[1], [0], [0], [1], [0, 0, 1, 1], [], []>} : vector<8x32xbf16>, vector<32x64xbf16>, vector<8x64xf32> -> vector<8x64xf32>
    %169 = vector.broadcast %18 : vector<1x64xf32> to vector<8x64xf32>
    %170 = arith.addf %168, %169 : vector<8x64xf32>
    %cst_55 = arith.constant 5.000000e-01 : f32
    %171 = vector.broadcast %cst_55 : f32 to vector<8x64xf32>
    %172 = arith.mulf %171, %170 : vector<8x64xf32>
    %cst_56 = arith.constant 4.471500e-02 : f32
    %173 = vector.broadcast %cst_56 : f32 to vector<8x64xf32>
    %174 = arith.mulf %173, %170 : vector<8x64xf32>
    %175 = arith.mulf %174, %170 : vector<8x64xf32>
    %176 = arith.mulf %175, %170 : vector<8x64xf32>
    %177 = arith.addf %170, %176 : vector<8x64xf32>
    %cst_57 = arith.constant 0.797884583 : f32
    %178 = vector.broadcast %cst_57 : f32 to vector<8x64xf32>
    %179 = arith.mulf %178, %177 : vector<8x64xf32>
    %180 = math.tanh %179 : vector<8x64xf32>
    %cst_58 = arith.constant 1.000000e+00 : f32
    %181 = vector.broadcast %cst_58 : f32 to vector<8x64xf32>
    %182 = arith.addf %181, %180 : vector<8x64xf32>
    %183 = arith.mulf %172, %182 : vector<8x64xf32>
    %184 = arith.truncf %183 : vector<8x64xf32> to vector<8x64xbf16>
    %c0_59 = arith.constant 0 : index
    %c0_60 = arith.constant 0 : index
    %c0_61 = arith.constant 0 : index
    %185 = vector.load %arg7[%c0_59, %c0_60, %c0_61] : memref<1x64x32xbf16, #tpu.memory_space<vmem>>, vector<1x64x32xbf16>
    %186 = vector.shape_cast %185 : vector<1x64x32xbf16> to vector<64x32xbf16>
    %cst_62 = arith.constant dense<0.000000e+00> : vector<8x32xf32>
    %187 = tpu.matmul %184, %186, %cst_62 {dimension_numbers = #tpu.dot_dimension_numbers<[1], [0], [0], [1], [0, 0, 1, 1], [], []>} : vector<8x64xbf16>, vector<64x32xbf16>, vector<8x32xf32> -> vector<8x32xf32>
    %188 = vector.broadcast %19 : vector<1x32xf32> to vector<8x32xf32>
    %189 = arith.addf %187, %188 : vector<8x32xf32>
    %190 = arith.addf %142, %189 : vector<8x32xf32>
    %191 = vector.extract_strided_slice %190 {offsets = [1, 0], sizes = [4, 32], strides = [1, 1]} : vector<8x32xf32> to vector<4x32xf32>
    %c0_63 = arith.constant 0 : index
    %c0_64 = arith.constant 0 : index
    %c0_65 = arith.constant 0 : index
    %192 = vector.load %arg9[%c0_63, %c0_64, %c0_65] : memref<1x4x32xf32, #tpu.memory_space<vmem>>, vector<1x4x32xf32>
    %193 = vector.shape_cast %192 : vector<1x4x32xf32> to vector<4x32xf32>
    %194 = vector.shape_cast %191 : vector<4x32xf32> to vector<1x4x32xf32>
    tpu.vector_store %arg9[%c0_63, %c0_64, %c0_65], %194 {strides = array<i32>} : memref<1x4x32xf32, #tpu.memory_space<vmem>>, vector<1x4x32xf32>,
    return
  }
  func.func @transform_0(%arg0: i32) -> (i32, i32, i32) {
    %c0_i32 = arith.constant 0 : i32
    %c0_i32_0 = arith.constant 0 : i32
    %c0_i32_1 = arith.constant 0 : i32
    return %arg0, %c0_i32, %c0_i32_0 : i32, i32, i32
  }
  func.func @transform_1(%arg0: i32) -> (i32, i32) {
    %c0_i32 = arith.constant 0 : i32
    %c0_i32_0 = arith.constant 0 : i32
    %c0_i32_1 = arith.constant 0 : i32
    return %c0_i32, %c0_i32_0 : i32, i32
  }
  func.func @transform_2(%arg0: i32) -> (i32, i32) {
    %c0_i32 = arith.constant 0 : i32
    %c0_i32_0 = arith.constant 0 : i32
    %c0_i32_1 = arith.constant 0 : i32
    return %c0_i32, %c0_i32_0 : i32, i32
  }
  func.func @transform_3(%arg0: i32) -> (i32, i32, i32) {
    %c0_i32 = arith.constant 0 : i32
    %c0_i32_0 = arith.constant 0 : i32
    %c0_i32_1 = arith.constant 0 : i32
    %c0_i32_2 = arith.constant 0 : i32
    return %c0_i32, %c0_i32_0, %c0_i32_1 : i32, i32, i32
  }
  func.func @transform_4(%arg0: i32) -> (i32, i32, i32) {
    %c0_i32 = arith.constant 0 : i32
    %c0_i32_0 = arith.constant 0 : i32
    %c0_i32_1 = arith.constant 0 : i32
    %c0_i32_2 = arith.constant 0 : i32
    return %c0_i32, %c0_i32_0, %c0_i32_1 : i32, i32, i32
  }
  func.func @transform_5(%arg0: i32) -> (i32, i32, i32) {
    %c0_i32 = arith.constant 0 : i32
    %c0_i32_0 = arith.constant 0 : i32
    %c0_i32_1 = arith.constant 0 : i32
    %c0_i32_2 = arith.constant 0 : i32
    return %c0_i32, %c0_i32_0, %c0_i32_1 : i32, i32, i32
  }
  func.func @transform_6(%arg0: i32) -> (i32, i32, i32) {
    %c0_i32 = arith.constant 0 : i32
    %c0_i32_0 = arith.constant 0 : i32
    %c0_i32_1 = arith.constant 0 : i32
    %c0_i32_2 = arith.constant 0 : i32
    return %c0_i32, %c0_i32_0, %c0_i32_1 : i32, i32, i32
  }
  func.func @transform_7(%arg0: i32) -> (i32, i32, i32) {
    %c0_i32 = arith.constant 0 : i32
    %c0_i32_0 = arith.constant 0 : i32
    %c0_i32_1 = arith.constant 0 : i32
    %c0_i32_2 = arith.constant 0 : i32
    return %c0_i32, %c0_i32_0, %c0_i32_1 : i32, i32, i32
  }
  func.func @transform_8(%arg0: i32) -> (i32, i32, i32) {
    %c0_i32 = arith.constant 0 : i32
    %c0_i32_0 = arith.constant 0 : i32
    %c0_i32_1 = arith.constant 0 : i32
    return %arg0, %c0_i32, %c0_i32_0 : i32, i32, i32
  }
}

</mosaic_0001>

<llo_original>
// kernel: encoder_forward.1
$region0: #{encoder_forward.1}
  #allocation0 [shape = 'u32[]', space=smem, size = 0x4, offset = 0x4, fixed_abs, tag = 'smem constant byte address 0x4 - core index']
  #allocation1 [shape = 'u32[144,128]{1,0:T(1,128)}', space=vmem, size = 0x12000, scoped, tag = 'internal scratch']
  %s0 = inlined_call_operand.vmem [shape: f32[2,8,256], index: 0, kind: input, shape index: {}]
  %s1 = inlined_call_operand.vmem [shape: bf16[256,32], index: 1, kind: input, shape index: {}]
  %s2 = inlined_call_operand.vmem [shape: f32[8,32], index: 2, kind: input, shape index: {}]
  %s3 = inlined_call_operand.vmem [shape: bf16[1,32,96], index: 3, kind: input, shape index: {}]
  %s4 = inlined_call_operand.vmem [shape: bf16[1,32,32], index: 4, kind: input, shape index: {}]
  %s5 = inlined_call_operand.vmem [shape: bf16[1,32,64], index: 5, kind: input, shape index: {}]
  %s6 = inlined_call_operand.vmem [shape: bf16[1,64,32], index: 6, kind: input, shape index: {}]
  %s7 = inlined_call_operand.vmem [shape: f32[1,8,128], index: 7, kind: input, shape index: {}]
  %s8 = inlined_call_operand.hbm [shape: f32[2,4,32], index: 8, kind: output, shape index: {}]
  %s9 = sld [smem:[#allocation0]]
  $region65: #{encoder_forward.1} parent=0
    _
  %s11 = ssub.s32 1, %s9
  %s12 = scalar_select 0, %s11, %s9
  $region1: #{encoder_forward.1} parent=0
    #allocation2 [shape = 'u8[4096]{0}', space=vmem, size = 0x1000, scoped, tag = 'output window, operand 0']
    #allocation3 [shape = 's32[2]{0}', space=sflag, size = 0x8, scoped, tag = 'scoped memory for encoder_forward.1']
    %13 = vsyncpa [#allocation3], 0
    %s14 = scalar_lea.sflag [#allocation3], 1
    %15 = vsyncpa %s14, 0
    loop: start=0, step=1, limit=4
    $region2: #{encoder_forward.1} parent=1 // loop_pre_header
      _
    $region3: #{encoder_forward.1} parent=1 // loop_header
      %s17 = sphi 0, %s21
      %p18 = scmp.ge.s32.totalorder %s17, 4
      %s27 = sphi 0, %s29
      %s30 = sphi 0, %s27
      %s31 = sphi 0, %s30
      %s47 = sphi 0, %s31
      %s51 = sphi 0, %s51
      %s53 = sphi 0, %s51
      %s54 = sphi 0, %s53
      %s68 = sphi 0, %s54
      %s72 = sphi 0, %s72
      %s74 = sphi 0, %s72
      %s75 = sphi 0, %s74
      %s89 = sphi 0, %s75
      %s93 = sphi 0, %s93
      %s95 = sphi 0, %s93
      %s96 = sphi 0, %s95
      %s110 = sphi 0, %s96
      %s114 = sphi 0, %s114
      %s116 = sphi 0, %s114
      %s117 = sphi 0, %s116
      %s131 = sphi 0, %s117
      %s135 = sphi 0, %s135
      %s137 = sphi 0, %s135
      %s138 = sphi 0, %s137
      %s152 = sphi 0, %s138
      %s156 = sphi 0, %s156
      %s158 = sphi 0, %s156
      %s159 = sphi 0, %s158
      %s173 = sphi 0, %s159
      %s177 = sphi 0, %s177
      %s179 = sphi 0, %s177
      %s180 = sphi 0, %s179
      %s194 = sphi 0, %s180
      %s200 = sphi 0, %s202
      %s203 = sphi 0, %s200
      %s204 = sphi 0, %s203
      %s220 = sphi 0, %s204
    $region4: #{encoder_forward.1} parent=1 // loop_header_branch
      %20 = sbr.rel (%p18) target = $region8
    $region5: #{encoder_forward.1} parent=1 // loop_body
      %s22 = ssub.s32 %s17, 1
      %s23 = ssub.s32 %s17, 2
      %s24 = sadd.s32 %s17, 1
      %s25 = ssub.s32 %s17, %s24
      %p26 = scmp.eq.s32.totalorder %s25, 0
      %s28 = sadd.s32 %s27, 1
      %s29 = scalar_select %p26, %s27, %s28
      %p32 = pneg %p26
      %p33 = scmp.eq.s32.totalorder %s17, 1
      %p34 = por %p32, %p33
      %p35 = scmp.ne.s32.totalorder %s27, %s30
      %p36 = scmp.eq.s32.totalorder %s17, 0
      %p37 = por %p35, %p36
      %p38 = scmp.ne.s32.totalorder %s27, %s30
      %p39 = scmp.eq.s32.totalorder %s22, 1
      %p40 = por %p38, %p39
      %p41 = scmp.ne.s32.totalorder %s30, %s31
      %p42 = scmp.eq.s32.totalorder %s22, 0
      %p43 = por %p41, %p42
      %p44 = scmp.ne.s32.totalorder %s30, %s31
      %p45 = scmp.eq.s32.totalorder %s23, 1
      %p46 = por %p44, %p45
      %p48 = scmp.ne.s32.totalorder %s31, %s47
      %p49 = scmp.eq.s32.totalorder %s23, 0
      %p50 = por %p48, %p49
      %s52 = sadd.s32 %s51, 1
      %p55 = scmp.eq.s32.totalorder %s17, 1
      %p56 = scmp.ne.s32.totalorder %s51, %s53
      %p57 = scmp.eq.s32.totalorder %s17, 0
      %p58 = por %p56, %p57
      %p59 = scmp.ne.s32.totalorder %s51, %s53
      %p60 = scmp.eq.s32.totalorder %s22, 1
      %p61 = por %p59, %p60
      %p62 = scmp.ne.s32.totalorder %s53, %s54
      %p63 = scmp.eq.s32.totalorder %s22, 0
      %p64 = por %p62, %p63
      %p65 = scmp.ne.s32.totalorder %s53, %s54
      %p66 = scmp.eq.s32.totalorder %s23, 1
      %p67 = por %p65, %p66
      %p69 = scmp.ne.s32.totalorder %s54, %s68
      %p70 = scmp.eq.s32.totalorder %s23, 0
      %p71 = por %p69, %p70
      %s73 = sadd.s32 %s72, 1
      %p76 = scmp.eq.s32.totalorder %s17, 1
      %p77 = scmp.ne.s32.totalorder %s72, %s74
      %p78 = scmp.eq.s32.totalorder %s17, 0
      %p79 = por %p77, %p78
      %p80 = scmp.ne.s32.totalorder %s72, %s74
      %p81 = scmp.eq.s32.totalorder %s22, 1
      %p82 = por %p80, %p81
      %p83 = scmp.ne.s32.totalorder %s74, %s75
      %p84 = scmp.eq.s32.totalorder %s22, 0
      %p85 = por %p83, %p84
      %p86 = scmp.ne.s32.totalorder %s74, %s75
      %p87 = scmp.eq.s32.totalorder %s23, 1
      %p88 = por %p86, %p87
      %p90 = scmp.ne.s32.totalorder %s75, %s89
      %p91 = scmp.eq.s32.totalorder %s23, 0
      %p92 = por %p90, %p91
      %s94 = sadd.s32 %s93, 1
      %p97 = scmp.eq.s32.totalorder %s17, 1
      %p98 = scmp.ne.s32.totalorder %s93, %s95
      %p99 = scmp.eq.s32.totalorder %s17, 0
      %p100 = por %p98, %p99
      %p101 = scmp.ne.s32.totalorder %s93, %s95
      %p102 = scmp.eq.s32.totalorder %s22, 1
      %p103 = por %p101, %p102
      %p104 = scmp.ne.s32.totalorder %s95, %s96
      %p105 = scmp.eq.s32.totalorder %s22, 0
      %p106 = por %p104, %p105
      %p107 = scmp.ne.s32.totalorder %s95, %s96
      %p108 = scmp.eq.s32.totalorder %s23, 1
      %p109 = por %p107, %p108
      %p111 = scmp.ne.s32.totalorder %s96, %s110
      %p112 = scmp.eq.s32.totalorder %s23, 0
      %p113 = por %p111, %p112
      %s115 = sadd.s32 %s114, 1
      %p118 = scmp.eq.s32.totalorder %s17, 1
      %p119 = scmp.ne.s32.totalorder %s114, %s116
      %p120 = scmp.eq.s32.totalorder %s17, 0
      %p121 = por %p119, %p120
      %p122 = scmp.ne.s32.totalorder %s114, %s116
      %p123 = scmp.eq.s32.totalorder %s22, 1
      %p124 = por %p122, %p123
      %p125 = scmp.ne.s32.totalorder %s116, %s117
      %p126 = scmp.eq.s32.totalorder %s22, 0
      %p127 = por %p125, %p126
      %p128 = scmp.ne.s32.totalorder %s116, %s117
      %p129 = scmp.eq.s32.totalorder %s23, 1
      %p130 = por %p128, %p129
      %p132 = scmp.ne.s32.totalorder %s117, %s131
      %p133 = scmp.eq.s32.totalorder %s23, 0
      %p134 = por %p132, %p133
      %s136 = sadd.s32 %s135, 1
      %p139 = scmp.eq.s32.totalorder %s17, 1
      %p140 = scmp.ne.s32.totalorder %s135, %s137
      %p141 = scmp.eq.s32.totalorder %s17, 0
      %p142 = por %p140, %p141
      %p143 = scmp.ne.s32.totalorder %s135, %s137
      %p144 = scmp.eq.s32.totalorder %s22, 1
      %p145 = por %p143, %p144
      %p146 = scmp.ne.s32.totalorder %s137, %s138
      %p147 = scmp.eq.s32.totalorder %s22, 0
      %p148 = por %p146, %p147
      %p149 = scmp.ne.s32.totalorder %s137, %s138
      %p150 = scmp.eq.s32.totalorder %s23, 1
      %p151 = por %p149, %p150
      %p153 = scmp.ne.s32.totalorder %s138, %s152
      %p154 = scmp.eq.s32.totalorder %s23, 0
      %p155 = por %p153, %p154
      %s157 = sadd.s32 %s156, 1
      %p160 = scmp.eq.s32.totalorder %s17, 1
      %p161 = scmp.ne.s32.totalorder %s156, %s158
      %p162 = scmp.eq.s32.totalorder %s17, 0
      %p163 = por %p161, %p162
      %p164 = scmp.ne.s32.totalorder %s156, %s158
      %p165 = scmp.eq.s32.totalorder %s22, 1
      %p166 = por %p164, %p165
      %p167 = scmp.ne.s32.totalorder %s158, %s159
      %p168 = scmp.eq.s32.totalorder %s22, 0
      %p169 = por %p167, %p168
      %p170 = scmp.ne.s32.totalorder %s158, %s159
      %p171 = scmp.eq.s32.totalorder %s23, 1
      %p172 = por %p170, %p171
      %p174 = scmp.ne.s32.totalorder %s159, %s173
      %p175 = scmp.eq.s32.totalorder %s23, 0
      %p176 = por %p174, %p175
      %s178 = sadd.s32 %s177, 1
      %p181 = scmp.eq.s32.totalorder %s17, 1
      %p182 = scmp.ne.s32.totalorder %s177, %s179
      %p183 = scmp.eq.s32.totalorder %s17, 0
      %p184 = por %p182, %p183
      %p185 = scmp.ne.s32.totalorder %s177, %s179
      %p186 = scmp.eq.s32.totalorder %s22, 1
      %p187 = por %p185, %p186
      %p188 = scmp.ne.s32.totalorder %s179, %s180
      %p189 = scmp.eq.s32.totalorder %s22, 0
      %p190 = por %p188, %p189
      %p191 = scmp.ne.s32.totalorder %s179, %s180
      %p192 = scmp.eq.s32.totalorder %s23, 1
      %p193 = por %p191, %p192
      %p195 = scmp.ne.s32.totalorder %s180, %s194
      %p196 = scmp.eq.s32.totalorder %s23, 0
      %p197 = por %p195, %p196
      %s198 = ssub.s32 %s17, %s24
      %p199 = scmp.eq.s32.totalorder %s198, 0
      %s201 = sadd.s32 %s200, 1
      %s202 = scalar_select %p199, %s200, %s201
      %p205 = pneg %p199
      %p206 = scmp.eq.s32.totalorder %s17, 1
      %p207 = por %p205, %p206
      %p208 = scmp.ne.s32.totalorder %s200, %s203
      %p209 = scmp.eq.s32.totalorder %s17, 0
      %p210 = por %p208, %p209
      %p211 = scmp.ne.s32.totalorder %s200, %s203
      %p212 = scmp.eq.s32.totalorder %s22, 1
      %p213 = por %p211, %p212
      %p214 = scmp.ne.s32.totalorder %s203, %s204
      %p215 = scmp.eq.s32.totalorder %s22, 0
      %p216 = por %p214, %p215
      %p217 = scmp.ne.s32.totalorder %s203, %s204
      %p218 = scmp.eq.s32.totalorder %s23, 1
      %p219 = por %p217, %p218
      %p221 = scmp.ne.s32.totalorder %s204, %s220
      %p222 = scmp.eq.s32.totalorder %s23, 0
      %p223 = por %p221, %p222
      %p224 = scmp.le.s32.totalorder 1, %s17
      %p225 = scmp.lt.s32.totalorder %s17, 3
      %p226 = pnand %p224, %p225
      %p227 = pneg %p226
      // Predicated region
      $region9: #{encoder_forward.1} parent=5 // pred_check
        _
      $region10: #{encoder_forward.1} parent=5 // pred_check_branch
        %229 = sbr.rel (%p226) target = $region12
      $region11: #{encoder_forward.1} parent=5 // pred_region
        %s230 = ssub.s32 %s17, 1
        // Predicated region
        $region13: #{encoder_forward.1} parent=11 // pred_check
          %p231 = pneg %p64
        $region14: #{encoder_forward.1} parent=11 // pred_check_branch
          %233 = sbr.rel (%p231) target = $region16
        $region15: #{encoder_forward.1} parent=11 // pred_region
          _
        $region16: #{encoder_forward.1} parent=11 // pred_fallthru
          _
        // Predicated region
        $region17: #{encoder_forward.1} parent=11 // pred_check
          %p234 = pneg %p85
        $region18: #{encoder_forward.1} parent=11 // pred_check_branch
          %236 = sbr.rel (%p234) target = $region20
        $region19: #{encoder_forward.1} parent=11 // pred_region
          _
        $region20: #{encoder_forward.1} parent=11 // pred_fallthru
          _
        // Predicated region
        $region21: #{encoder_forward.1} parent=11 // pred_check
          %p237 = pneg %p106
        $region22: #{encoder_forward.1} parent=11 // pred_check_branch
          %239 = sbr.rel (%p237) target = $region24
        $region23: #{encoder_forward.1} parent=11 // pred_region
          _
        $region24: #{encoder_forward.1} parent=11 // pred_fallthru
          _
        // Predicated region
        $region25: #{encoder_forward.1} parent=11 // pred_check
          %p240 = pneg %p127
        $region26: #{encoder_forward.1} parent=11 // pred_check_branch
          %242 = sbr.rel (%p240) target = $region28
        $region27: #{encoder_forward.1} parent=11 // pred_region
          _
        $region28: #{encoder_forward.1} parent=11 // pred_fallthru
          _
        // Predicated region
        $region29: #{encoder_forward.1} parent=11 // pred_check
          %p243 = pneg %p148
        $region30: #{encoder_forward.1} parent=11 // pred_check_branch
          %245 = sbr.rel (%p243) target = $region32
        $region31: #{encoder_forward.1} parent=11 // pred_region
          _
        $region32: #{encoder_forward.1} parent=11 // pred_fallthru
          _
        // Predicated region
        $region33: #{encoder_forward.1} parent=11 // pred_check
          %p246 = pneg %p169
        $region34: #{encoder_forward.1} parent=11 // pred_check_branch
          %248 = sbr.rel (%p246) target = $region36
        $region35: #{encoder_forward.1} parent=11 // pred_region
          _
        $region36: #{encoder_forward.1} parent=11 // pred_fallthru
          _
        // Predicated region
        $region37: #{encoder_forward.1} parent=11 // pred_check
          %p249 = pneg %p190
        $region38: #{encoder_forward.1} parent=11 // pred_check_branch
          %251 = sbr.rel (%p249) target = $region40
        $region39: #{encoder_forward.1} parent=11 // pred_region
          _
        $region40: #{encoder_forward.1} parent=11 // pred_fallthru
          _
      $region12: #{encoder_forward.1} parent=5 // pred_fallthru
        _
      %p252 = scmp.lt.s32.totalorder %s17, 2
      // Predicated region
      $region41: #{encoder_forward.1} parent=5 // pred_check
        %p253 = pneg %p252
      $region42: #{encoder_forward.1} parent=5 // pred_check_branch
        %255 = sbr.rel (%p253) target = $region44
      $region43: #{encoder_forward.1} parent=5 // pred_region
        // Predicated region
        $region45: #{encoder_forward.1} parent=43 // pred_check
          %p256 = pneg %p37
        $region46: #{encoder_forward.1} parent=43 // pred_check_branch
          %258 = sbr.rel (%p256) target = $region48
        $region47: #{encoder_forward.1} parent=43 // pred_region
          %p259 = scmp.lt.s32.totalorder %s17, 1
          %s260 = scalar_select %p259, %s17, 1
          %s261 = smul.addr %s260, 2
          %s262 = smul.addr %s261, 8
          %s263 = scalar_lea.vmem %s0, %s262
        $region48: #{encoder_forward.1} parent=43 // pred_fallthru
          _
      $region44: #{encoder_forward.1} parent=5 // pred_fallthru
        _
      %p264 = scmp.le.s32.totalorder 1, %s17
      %p265 = scmp.lt.s32.totalorder %s17, 3
      %p266 = pnand %p264, %p265
      %p267 = pneg %p266
      // Predicated region
      $region49: #{encoder_forward.1} parent=5 // pred_check
        _
      $region50: #{encoder_forward.1} parent=5 // pred_check_branch
        %269 = sbr.rel (%p266) target = $region52
      $region51: #{encoder_forward.1} parent=5 // pred_region
        %s270 = ssub.s32 %s17, 1
        %p271 = scmp.lt.s32.totalorder %s22, 1
        %s272 = scalar_select %p271, %s22, 1
        %s273 = smul.addr %s272, 2
        %s274 = smul.addr %s273, 8
        %s275 = scalar_lea.vmem %s0, %s274
        %p276 = pneg %p43
        %p277 = pneg %p40
        %p278 = pneg %p64
        %p279 = pneg %p61
        %p280 = pneg %p85
        %p281 = pneg %p82
        %p282 = pneg %p106
        %p283 = pneg %p103
        %p284 = pneg %p127
        %p285 = pneg %p124
        %p286 = pneg %p148
        %p287 = pneg %p145
        %p288 = pneg %p169
        %p289 = pneg %p166
        %p290 = pneg %p190
        %p291 = pneg %p187
        %p292 = pneg %p216
        %p293 = pneg %p213
        %s294 = sand.u32 %s203, 1
        %s295 = scalar_lea.sflag [#allocation3], %s294
        %s296 = sand.u32 %s203, 1
        %s297 = smul.addr %s296, 4
        %s298 = scalar_lea.vmem [#allocation2], %s297
        %p299 = scmp.lt.s32.totalorder %s22, 1
        %s300 = scalar_select %p299, %s22, 1
        %s301 = smul.addr %s300, 2
        %s302 = smul.addr %s301, 8
        %s303 = scalar_lea.vmem %s0, %s302
        %v305 = vld [vmem:[%s303] sm:$0xff]
        %v306 = vld [vmem:[%s303 + $0x8] sm:$0xff]
        %v307 = vpack.c.bf16 %v305, %v305
        %v308 = vpack.c.bf16 %v306, %v306
        %v309 = vld [vmem:[%s1] sm:$0xf]
        %v310 = vld [vmem:[%s1 + $0x4] sm:$0xf]
        %v311 = vld [vmem:[%s1 + $0x8] sm:$0xf]
        %v312 = vld [vmem:[%s1 + $0xc] sm:$0xf]
        %v313 = vld [vmem:[%s1 + $0x10] sm:$0xf]
        %v314 = vld [vmem:[%s1 + $0x14] sm:$0xf]
        %v315 = vld [vmem:[%s1 + $0x18] sm:$0xf]
        %v316 = vld [vmem:[%s1 + $0x1c] sm:$0xf]
        %v317 = vld [vmem:[%s1 + $0x20] sm:$0xf]
        %v318 = vld [vmem:[%s1 + $0x24] sm:$0xf]
        %v319 = vld [vmem:[%s1 + $0x28] sm:$0xf]
        %v320 = vld [vmem:[%s1 + $0x2c] sm:$0xf]
        %v321 = vld [vmem:[%s1 + $0x30] sm:$0xf]
        %v322 = vld [vmem:[%s1 + $0x34] sm:$0xf]
        %v323 = vld [vmem:[%s1 + $0x38] sm:$0xf]
        %v324 = vld [vmem:[%s1 + $0x3c] sm:$0xf]
        %v325 = vld [vmem:[%s1 + $0x40] sm:$0xf]
        %v326 = vld [vmem:[%s1 + $0x44] sm:$0xf]
        %v327 = vld [vmem:[%s1 + $0x48] sm:$0xf]
        %v328 = vld [vmem:[%s1 + $0x4c] sm:$0xf]
        %v329 = vld [vmem:[%s1 + $0x50] sm:$0xf]
        %v330 = vld [vmem:[%s1 + $0x54] sm:$0xf]
        %v331 = vld [vmem:[%s1 + $0x58] sm:$0xf]
        %v332 = vld [vmem:[%s1 + $0x5c] sm:$0xf]
        %v333 = vld [vmem:[%s1 + $0x60] sm:$0xf]
        %v334 = vld [vmem:[%s1 + $0x64] sm:$0xf]
        %v335 = vld [vmem:[%s1 + $0x68] sm:$0xf]
        %v336 = vld [vmem:[%s1 + $0x6c] sm:$0xf]
        %v337 = vld [vmem:[%s1 + $0x70] sm:$0xf]
        %v338 = vld [vmem:[%s1 + $0x74] sm:$0xf]
        %v339 = vld [vmem:[%s1 + $0x78] sm:$0xf]
        %v340 = vld [vmem:[%s1 + $0x7c] sm:$0xf]
        %v341 = vld [vmem:[%s2] sm:$0xff]
        %v374 = vunpack.c.l.b16 %v309
        %v375 = vunpack.c.l.b16 %v310
        %v376 = vunpack.c.l.b16 %v311
        %v377 = vunpack.c.l.b16 %v312
        %v378 = vunpack.c.l.b16 %v313
        %v379 = vunpack.c.l.b16 %v314
        %v380 = vunpack.c.l.b16 %v315
        %v381 = vunpack.c.l.b16 %v316
        %v382 = vunpack.c.l.b16 %v317
        %v383 = vunpack.c.l.b16 %v318
        %v384 = vunpack.c.l.b16 %v319
        %v385 = vunpack.c.l.b16 %v320
        %v386 = vunpack.c.l.b16 %v321
        %v387 = vunpack.c.l.b16 %v322
        %v388 = vunpack.c.l.b16 %v323
        %v389 = vunpack.c.l.b16 %v324
        %v390 = vunpack.c.l.b16 %v325
        %v391 = vunpack.c.l.b16 %v326
        %v392 = vunpack.c.l.b16 %v327
        %v393 = vunpack.c.l.b16 %v328
        %v394 = vunpack.c.l.b16 %v329
        %v395 = vunpack.c.l.b16 %v330
        %v396 = vunpack.c.l.b16 %v331
        %v397 = vunpack.c.l.b16 %v332
        %v398 = vunpack.c.l.b16 %v333
        %v399 = vunpack.c.l.b16 %v334
        %v400 = vunpack.c.l.b16 %v335
        %v401 = vunpack.c.l.b16 %v336
        %v402 = vunpack.c.l.b16 %v337
        %v403 = vunpack.c.l.b16 %v338
        %v404 = vunpack.c.l.b16 %v339
        %v405 = vunpack.c.l.b16 %v340
        %v406 = vpack.c.b16 %v375, %v374
        %v407 = vpack.c.b16 %v377, %v376
        %v408 = vpack.c.b16 %v379, %v378
        %v409 = vpack.c.b16 %v381, %v380
        %v410 = vpack.c.b16 %v383, %v382
        %v411 = vpack.c.b16 %v385, %v384
        %v412 = vpack.c.b16 %v387, %v386
        %v413 = vpack.c.b16 %v389, %v388
        %v414 = vpack.c.b16 %v391, %v390
        %v415 = vpack.c.b16 %v393, %v392
        %v416 = vpack.c.b16 %v395, %v394
        %v417 = vpack.c.b16 %v397, %v396
        %v418 = vpack.c.b16 %v399, %v398
        %v419 = vpack.c.b16 %v401, %v400
        %v420 = vpack.c.b16 %v403, %v402
        %v421 = vpack.c.b16 %v405, %v404
        %438 = vmatprep.subr.bf16.mxu0 0
        %439 = vmatpush1.bf16.msra.mxu0 %v406
        %440 = vmatprep.subr.bf16.mxu0 0
        %441 = vmatpush1.bf16.msra.mxu0 %v407
        %442 = vmatprep.subr.bf16.mxu0 0
        %443 = vmatpush1.bf16.msra.mxu0 %v408
        %444 = vmatprep.subr.bf16.mxu0 0
        %445 = vmatpush1.bf16.msra.mxu0 %v409
        %446 = vmatprep.subr.bf16.mxu0 0
        %447 = vmatpush1.bf16.msra.mxu0 %v410
        %448 = vmatprep.subr.bf16.mxu0 0
        %449 = vmatpush1.bf16.msra.mxu0 %v411
        %450 = vmatprep.subr.bf16.mxu0 0
        %451 = vmatpush1.bf16.msra.mxu0 %v412
        %452 = vmatprep.subr.bf16.mxu0 0
        %453 = vmatpush1.bf16.msra.mxu0 %v413
        %454 = vmatprep.subr.bf16.mxu0 0
        %455 = vmatpush1.bf16.msra.mxu0 %v414
        %456 = vmatprep.subr.bf16.mxu0 0
        %457 = vmatpush1.bf16.msra.mxu0 %v415
        %458 = vmatprep.subr.bf16.mxu0 0
        %459 = vmatpush1.bf16.msra.mxu0 %v416
        %460 = vmatprep.subr.bf16.mxu0 0
        %461 = vmatpush1.bf16.msra.mxu0 %v417
        %462 = vmatprep.subr.bf16.mxu0 0
        %463 = vmatpush1.bf16.msra.mxu0 %v418
        %464 = vmatprep.subr.bf16.mxu0 0
        %465 = vmatpush1.bf16.msra.mxu0 %v419
        %466 = vmatprep.subr.bf16.mxu0 0
        %467 = vmatpush1.bf16.msra.mxu0 %v420
        %468 = vmatprep.subr.bf16.mxu0 0
        %469 = vmatpush1.bf16.msra.mxu0 %v421
        %470 = vmatprep.mubr.bf16.mxu0 %v308
        %471 = vmatmul.mubr.bf16.gmra.mrb[0].mxu0 %v307
        %v472 = vpop.f32.mrb[0].mxu0
        %v473 = vadd.f32 %v341, %v472
        %v474 = vpop.f32.mrb[0].mxu0
        %v475 = vpop.f32.mrb[0].mxu0
        %v476 = vpop.f32.mrb[0].mxu0
        %477 = vdwg.mxu0
        %v478 = vlaneseq
        %v479 = vand.u32 %v478, 127
        %vm480 = vcmp.lt.s32.totalorder %v479, 5
        %v481 = vld [vmem:[%s7] sm:$0xff]
        %vm482 = vcmask 261120
        %v483 = vsel %vm482, %v473, 0.0
        %484 = vadd.xlane.f32.xlu0 %v483
        %v485 = vpop.xlane.xlu0 %484
        %v486 = vrcp.pop 32.0
        %v487 = vmul.f32 %v485, %v486
        %v488 = vsub.f32 %v473, %v487
        %v489 = vmul.f32 %v488, %v488
        %v490 = vsel %vm482, %v489, 0.0
        %491 = vadd.xlane.f32.xlu0 %v490
        %v492 = vpop.xlane.xlu0 %491
        %v493 = vmul.f32 %v492, %v486
        %v494 = vadd.f32 %v493, 1e-06
        %v495 = vrsqrt.pop %v494
        %v496 = vmul.f32 %v488, %v495
        %v497 = vlaneseq
        %v498 = vshrl.u32 %v497, 7
        %v499 = vsub.s32 0, %v498
        %v500 = vrot.slane %v481, %v499
        %v501 = vmul.f32 %v496, %v500
        %v502 = vlaneseq
        %v503 = vshrl.u32 %v502, 7
        %v504 = vsub.s32 1, %v503
        %v505 = vrot.slane %v481, %v504
        %v506 = vadd.f32 %v501, %v505
        %v507 = vpack.c.bf16 %v506, %v506
        %v508 = vld [vmem:[%s3] sm:$0xf]
        %v509 = vld [vmem:[%s3 + $0x4] sm:$0xf]
        %v510 = vld [vmem:[%s3 + $0x8] sm:$0xf]
        %v511 = vld [vmem:[%s3 + $0xc] sm:$0xf]
        %v512 = vlaneseq
        %v513 = vshrl.u32 %v512, 7
        %v514 = vsub.s32 2, %v513
        %v515 = vrot.slane %v481, %v514
        %v520 = vunpack.c.l.b16 %v508
        %v521 = vunpack.c.l.b16 %v509
        %v522 = vunpack.c.l.b16 %v510
        %v523 = vunpack.c.l.b16 %v511
        %v524 = vpack.c.b16 %v521, %v520
        %v525 = vpack.c.b16 %v523, %v522
        %v529 = vsel %vm482, %v507, 0
        %531 = vmatprep.subr.bf16.mxu0 0
        %532 = vmatpush1.bf16.msra.mxu0 %v524
        %533 = vmatprep.subr.bf16.mxu0 0
        %534 = vmatpush1.bf16.msra.mxu0 %v525
        %535 = vmatprep.subr.bf16.mxu0 0
        %536 = vmatpush1.bf16.msra.mxu0 0
        %537 = vmatprep.subr.bf16.mxu0 0
        %538 = vmatpush1.bf16.msra.mxu0 0
        %539 = vmatprep.subr.bf16.mxu0 0
        %540 = vmatpush1.bf16.msra.mxu0 0
        %541 = vmatprep.subr.bf16.mxu0 0
        %542 = vmatpush1.bf16.msra.mxu0 0
        %543 = vmatprep.subr.bf16.mxu0 0
        %544 = vmatpush1.bf16.msra.mxu0 0
        %545 = vmatprep.subr.bf16.mxu0 0
        %546 = vmatpush1.bf16.msra.mxu0 0
        %547 = vmatprep.subr.bf16.mxu0 0
        %548 = vmatpush1.bf16.msra.mxu0 0
        %549 = vmatprep.subr.bf16.mxu0 0
        %550 = vmatpush1.bf16.msra.mxu0 0
        %551 = vmatprep.subr.bf16.mxu0 0
        %552 = vmatpush1.bf16.msra.mxu0 0
        %553 = vmatprep.subr.bf16.mxu0 0
        %554 = vmatpush1.bf16.msra.mxu0 0
        %555 = vmatprep.subr.bf16.mxu0 0
        %556 = vmatpush1.bf16.msra.mxu0 0
        %557 = vmatprep.subr.bf16.mxu0 0
        %558 = vmatpush1.bf16.msra.mxu0 0
        %559 = vmatprep.subr.bf16.mxu0 0
        %560 = vmatpush1.bf16.msra.mxu0 0
        %561 = vmatprep.subr.bf16.mxu0 0
        %562 = vmatpush1.bf16.msra.mxu0 0
        %563 = vmatprep.mubr.bf16.mxu0 0
        %564 = vmatmul.mubr.bf16.gmra.mrb[0].mxu0 %v529
        %v565 = vpop.f32.mrb[0].mxu0
        %v566 = vadd.f32 %v515, %v565
        %v567 = vpop.f32.mrb[0].mxu0
        %v568 = vpop.f32.mrb[0].mxu0
        %v569 = vpop.f32.mrb[0].mxu0
        %570 = vdwg.mxu0
        %v571 = vpack.c.bf16 %v566, %v566
        %v572 = vld [vmem:[%s4] sm:$0xf]
        %v573 = vld [vmem:[%s4 + $0x4] sm:$0xf]
        %v574 = vld [vmem:[%s4 + $0x8] sm:$0xf]
        %v575 = vld [vmem:[%s4 + $0xc] sm:$0xf]
        %577 = vrot.lane.b32.xlu0 %v571, 96
        %v578 = vpop.permute.xlu0 %577
        %vm579 = vcmask 64512
        %v581 = vsel %vm579, %v571, 0
        %v584 = vsel %vm579, %v578, 0
        %586 = vmatprep.subr.bf16.mxu0 0
        %587 = vmatpush1.bf16.xpose.msra.mxu0 %v584
        %588 = vmatprep.subr.bf16.mxu0 0
        %589 = vmatpush1.bf16.xpose.msra.mxu0 0
        %590 = vmatprep.subr.bf16.mxu0 0
        %591 = vmatpush1.bf16.xpose.msra.mxu0 0
        %592 = vmatprep.subr.bf16.mxu0 0
        %593 = vmatpush1.bf16.xpose.msra.mxu0 0
        %594 = vmatprep.subr.bf16.mxu0 0
        %595 = vmatpush1.bf16.xpose.msra.mxu0 0
        %596 = vmatprep.subr.bf16.mxu0 0
        %597 = vmatpush1.bf16.xpose.msra.mxu0 0
        %598 = vmatprep.subr.bf16.mxu0 0
        %599 = vmatpush1.bf16.xpose.msra.mxu0 0
        %600 = vmatprep.subr.bf16.mxu0 0
        %601 = vmatpush1.bf16.xpose.msra.mxu0 0
        %602 = vmatprep.subr.bf16.mxu0 0
        %603 = vmatpush1.bf16.xpose.msra.mxu0 0
        %604 = vmatprep.subr.bf16.mxu0 0
        %605 = vmatpush1.bf16.xpose.msra.mxu0 0
        %606 = vmatprep.subr.bf16.mxu0 0
        %607 = vmatpush1.bf16.xpose.msra.mxu0 0
        %608 = vmatprep.subr.bf16.mxu0 0
        %609 = vmatpush1.bf16.xpose.msra.mxu0 0
        %610 = vmatprep.subr.bf16.mxu0 0
        %611 = vmatpush1.bf16.xpose.msra.mxu0 0
        %612 = vmatprep.subr.bf16.mxu0 0
        %613 = vmatpush1.bf16.xpose.msra.mxu0 0
        %614 = vmatprep.subr.bf16.mxu0 0
        %615 = vmatpush1.bf16.xpose.msra.mxu0 0
        %616 = vmatprep.subr.bf16.mxu0 0
        %617 = vmatpush1.bf16.xpose.msra.mxu0 0
        %618 = vmatprep.mubr.bf16.mxu0 0
        %619 = vmatmul.mubr.bf16.gmra.mrb[0].mxu0 %v581
        %v620 = vpop.f32.mrb[0].mxu0
        %v621 = vadd.f32 0.0, %v620
        %v622 = vpop.f32.mrb[0].mxu0
        %v623 = vpop.f32.mrb[0].mxu0
        %v624 = vpop.f32.mrb[0].mxu0
        %625 = vdwg.mxu0
        %v626 = vsel %vm480, %v621, -1e+30
        %v627 = vsel %vm579, %v626, -inf
        %628 = vmax.xlane.f32.xlu0 %v627
        %v629 = vpop.xlane.xlu0 %628
        %v630 = vsub.f32 %v626, %v629
        %v631 = vmul.f32 %v630, 1.442695
        %v632 = vpow.pop %v631
        %v633 = vsel %vm579, %v632, 0.0
        %634 = vadd.xlane.f32.xlu0 %v633
        %v635 = vpop.xlane.xlu0 %634
        %v636 = vrcp.pop %v635
        %v637 = vmul.f32 %v632, %v636
        %v638 = vpack.c.bf16 %v637, %v637
        %639 = vrot.lane.b32.xlu0 %v571, 64
        %v640 = vpop.permute.xlu0 %639
        %v642 = vsel %vm579, %v638, 0
        %vm644 = vcmask 1043456
        %v646 = vsel %vm644, %v640, 0
        %648 = vmatprep.subr.bf16.mxu0 0
        %649 = vmatpush1.bf16.msra.mxu0 %v646
        %650 = vmatprep.subr.bf16.mxu0 0
        %651 = vmatpush1.bf16.msra.mxu0 0
        %652 = vmatprep.subr.bf16.mxu0 0
        %653 = vmatpush1.bf16.msra.mxu0 0
        %654 = vmatprep.subr.bf16.mxu0 0
        %655 = vmatpush1.bf16.msra.mxu0 0
        %656 = vmatprep.subr.bf16.mxu0 0
        %657 = vmatpush1.bf16.msra.mxu0 0
        %658 = vmatprep.subr.bf16.mxu0 0
        %659 = vmatpush1.bf16.msra.mxu0 0
        %660 = vmatprep.subr.bf16.mxu0 0
        %661 = vmatpush1.bf16.msra.mxu0 0
        %662 = vmatprep.subr.bf16.mxu0 0
        %663 = vmatpush1.bf16.msra.mxu0 0
        %664 = vmatprep.subr.bf16.mxu0 0
        %665 = vmatpush1.bf16.msra.mxu0 0
        %666 = vmatprep.subr.bf16.mxu0 0
        %667 = vmatpush1.bf16.msra.mxu0 0
        %668 = vmatprep.subr.bf16.mxu0 0
        %669 = vmatpush1.bf16.msra.mxu0 0
        %670 = vmatprep.subr.bf16.mxu0 0
        %671 = vmatpush1.bf16.msra.mxu0 0
        %672 = vmatprep.subr.bf16.mxu0 0
        %673 = vmatpush1.bf16.msra.mxu0 0
        %674 = vmatprep.subr.bf16.mxu0 0
        %675 = vmatpush1.bf16.msra.mxu0 0
        %676 = vmatprep.subr.bf16.mxu0 0
        %677 = vmatpush1.bf16.msra.mxu0 0
        %678 = vmatprep.subr.bf16.mxu0 0
        %679 = vmatpush1.bf16.msra.mxu0 0
        %680 = vmatprep.mubr.bf16.mxu0 0
        %681 = vmatmul.mubr.bf16.gmra.mrb[0].mxu0 %v642
        %v682 = vpop.f32.mrb[0].mxu0
        %v683 = vadd.f32 0.0, %v682
        %v684 = vpop.f32.mrb[0].mxu0
        %v685 = vpop.f32.mrb[0].mxu0
        %v686 = vpop.f32.mrb[0].mxu0
        %687 = vdwg.mxu0
        %v688 = vpack.c.bf16 %v683, %v683
        %689 = vrot.lane.b32.xlu0 %v571, 120
        %v690 = vpop.permute.xlu0 %689
        %691 = vrot.lane.b32.xlu0 %v571, 88
        %v692 = vpop.permute.xlu0 %691
        %v694 = vsel %vm579, %v690, 0
        %v697 = vsel %vm579, %v692, 0
        %699 = vmatprep.subr.bf16.mxu0 0
        %700 = vmatpush1.bf16.xpose.msra.mxu0 %v697
        %701 = vmatprep.subr.bf16.mxu0 0
        %702 = vmatpush1.bf16.xpose.msra.mxu0 0
        %703 = vmatprep.subr.bf16.mxu0 0
        %704 = vmatpush1.bf16.xpose.msra.mxu0 0
        %705 = vmatprep.subr.bf16.mxu0 0
        %706 = vmatpush1.bf16.xpose.msra.mxu0 0
        %707 = vmatprep.subr.bf16.mxu0 0
        %708 = vmatpush1.bf16.xpose.msra.mxu0 0
        %709 = vmatprep.subr.bf16.mxu0 0
        %710 = vmatpush1.bf16.xpose.msra.mxu0 0
        %711 = vmatprep.subr.bf16.mxu0 0
        %712 = vmatpush1.bf16.xpose.msra.mxu0 0
        %713 = vmatprep.subr.bf16.mxu0 0
        %714 = vmatpush1.bf16.xpose.msra.mxu0 0
        %715 = vmatprep.subr.bf16.mxu0 0
        %716 = vmatpush1.bf16.xpose.msra.mxu0 0
        %717 = vmatprep.subr.bf16.mxu0 0
        %718 = vmatpush1.bf16.xpose.msra.mxu0 0
        %719 = vmatprep.subr.bf16.mxu0 0
        %720 = vmatpush1.bf16.xpose.msra.mxu0 0
        %721 = vmatprep.subr.bf16.mxu0 0
        %722 = vmatpush1.bf16.xpose.msra.mxu0 0
        %723 = vmatprep.subr.bf16.mxu0 0
        %724 = vmatpush1.bf16.xpose.msra.mxu0 0
        %725 = vmatprep.subr.bf16.mxu0 0
        %726 = vmatpush1.bf16.xpose.msra.mxu0 0
        %727 = vmatprep.subr.bf16.mxu0 0
        %728 = vmatpush1.bf16.xpose.msra.mxu0 0
        %729 = vmatprep.subr.bf16.mxu0 0
        %730 = vmatpush1.bf16.xpose.msra.mxu0 0
        %731 = vmatprep.mubr.bf16.mxu0 0
        %732 = vmatmul.mubr.bf16.gmra.mrb[0].mxu0 %v694
        %v733 = vpop.f32.mrb[0].mxu0
        %v734 = vadd.f32 0.0, %v733
        %v735 = vpop.f32.mrb[0].mxu0
        %v736 = vpop.f32.mrb[0].mxu0
        %v737 = vpop.f32.mrb[0].mxu0
        %738 = vdwg.mxu0
        %v739 = vsel %vm480, %v734, -1e+30
        %v740 = vsel %vm579, %v739, -inf
        %741 = vmax.xlane.f32.xlu0 %v740
        %v742 = vpop.xlane.xlu0 %741
        %v743 = vsub.f32 %v739, %v742
        %v744 = vmul.f32 %v743, 1.442695
        %v745 = vpow.pop %v744
        %v746 = vsel %vm579, %v745, 0.0
        %747 = vadd.xlane.f32.xlu0 %v746
        %v748 = vpop.xlane.xlu0 %747
        %v749 = vrcp.pop %v748
        %v750 = vmul.f32 %v745, %v749
        %v751 = vpack.c.bf16 %v750, %v750
        %752 = vrot.lane.b32.xlu0 %v571, 56
        %v753 = vpop.permute.xlu0 %752
        %v755 = vsel %vm579, %v751, 0
        %v758 = vsel %vm644, %v753, 0
        %760 = vmatprep.subr.bf16.mxu0 0
        %761 = vmatpush1.bf16.msra.mxu0 %v758
        %762 = vmatprep.subr.bf16.mxu0 0
        %763 = vmatpush1.bf16.msra.mxu0 0
        %764 = vmatprep.subr.bf16.mxu0 0
        %765 = vmatpush1.bf16.msra.mxu0 0
        %766 = vmatprep.subr.bf16.mxu0 0
        %767 = vmatpush1.bf16.msra.mxu0 0
        %768 = vmatprep.subr.bf16.mxu0 0
        %769 = vmatpush1.bf16.msra.mxu0 0
        %770 = vmatprep.subr.bf16.mxu0 0
        %771 = vmatpush1.bf16.msra.mxu0 0
        %772 = vmatprep.subr.bf16.mxu0 0
        %773 = vmatpush1.bf16.msra.mxu0 0
        %774 = vmatprep.subr.bf16.mxu0 0
        %775 = vmatpush1.bf16.msra.mxu0 0
        %776 = vmatprep.subr.bf16.mxu0 0
        %777 = vmatpush1.bf16.msra.mxu0 0
        %778 = vmatprep.subr.bf16.mxu0 0
        %779 = vmatpush1.bf16.msra.mxu0 0
        %780 = vmatprep.subr.bf16.mxu0 0
        %781 = vmatpush1.bf16.msra.mxu0 0
        %782 = vmatprep.subr.bf16.mxu0 0
        %783 = vmatpush1.bf16.msra.mxu0 0
        %784 = vmatprep.subr.bf16.mxu0 0
        %785 = vmatpush1.bf16.msra.mxu0 0
        %786 = vmatprep.subr.bf16.mxu0 0
        %787 = vmatpush1.bf16.msra.mxu0 0
        %788 = vmatprep.subr.bf16.mxu0 0
        %789 = vmatpush1.bf16.msra.mxu0 0
        %790 = vmatprep.subr.bf16.mxu0 0
        %791 = vmatpush1.bf16.msra.mxu0 0
        %792 = vmatprep.mubr.bf16.mxu0 0
        %793 = vmatmul.mubr.bf16.gmra.mrb[0].mxu0 %v755
        %v794 = vpop.f32.mrb[0].mxu0
        %v795 = vadd.f32 0.0, %v794
        %v796 = vpop.f32.mrb[0].mxu0
        %v797 = vpop.f32.mrb[0].mxu0
        %v798 = vpop.f32.mrb[0].mxu0
        %799 = vdwg.mxu0
        %v800 = vpack.c.bf16 %v795, %v795
        %v802 = vsel %vm579, %v800, 0
        %v805 = vsel %vm644, %v573, 0
        %807 = vmatprep.subr.bf16.mxu0 0
        %808 = vmatpush1.bf16.msra.mxu0 %v805
        %809 = vmatprep.subr.bf16.mxu0 0
        %810 = vmatpush1.bf16.msra.mxu0 0
        %811 = vmatprep.subr.bf16.mxu0 0
        %812 = vmatpush1.bf16.msra.mxu0 0
        %813 = vmatprep.subr.bf16.mxu0 0
        %814 = vmatpush1.bf16.msra.mxu0 0
        %815 = vmatprep.subr.bf16.mxu0 0
        %816 = vmatpush1.bf16.msra.mxu0 0
        %817 = vmatprep.subr.bf16.mxu0 0
        %818 = vmatpush1.bf16.msra.mxu0 0
        %819 = vmatprep.subr.bf16.mxu0 0
        %820 = vmatpush1.bf16.msra.mxu0 0
        %821 = vmatprep.subr.bf16.mxu0 0
        %822 = vmatpush1.bf16.msra.mxu0 0
        %823 = vmatprep.subr.bf16.mxu0 0
        %824 = vmatpush1.bf16.msra.mxu0 0
        %825 = vmatprep.subr.bf16.mxu0 0
        %826 = vmatpush1.bf16.msra.mxu0 0
        %827 = vmatprep.subr.bf16.mxu0 0
        %828 = vmatpush1.bf16.msra.mxu0 0
        %829 = vmatprep.subr.bf16.mxu0 0
        %830 = vmatpush1.bf16.msra.mxu0 0
        %831 = vmatprep.subr.bf16.mxu0 0
        %832 = vmatpush1.bf16.msra.mxu0 0
        %833 = vmatprep.subr.bf16.mxu0 0
        %834 = vmatpush1.bf16.msra.mxu0 0
        %835 = vmatprep.subr.bf16.mxu0 0
        %836 = vmatpush1.bf16.msra.mxu0 0
        %837 = vmatprep.subr.bf16.mxu0 0
        %838 = vmatpush1.bf16.msra.mxu0 0
        %839 = vmatprep.mubr.bf16.mxu0 0
        %840 = vmatmul.mubr.bf16.gmra.mrb[0].mxu0 %v802
        %v841 = vpop.f32.mrb[0].mxu0
        %v842 = vadd.f32 0.0, %v841
        %v843 = vpop.f32.mrb[0].mxu0
        %v844 = vpop.f32.mrb[0].mxu0
        %v845 = vpop.f32.mrb[0].mxu0
        %846 = vdwg.mxu0
        %v848 = vsel %vm579, %v688, 0
        %v851 = vsel %vm644, %v572, 0
        %853 = vmatprep.subr.bf16.mxu0 0
        %854 = vmatpush1.bf16.msra.mxu0 %v851
        %855 = vmatprep.subr.bf16.mxu0 0
        %856 = vmatpush1.bf16.msra.mxu0 0
        %857 = vmatprep.subr.bf16.mxu0 0
        %858 = vmatpush1.bf16.msra.mxu0 0
        %859 = vmatprep.subr.bf16.mxu0 0
        %860 = vmatpush1.bf16.msra.mxu0 0
        %861 = vmatprep.subr.bf16.mxu0 0
        %862 = vmatpush1.bf16.msra.mxu0 0
        %863 = vmatprep.subr.bf16.mxu0 0
        %864 = vmatpush1.bf16.msra.mxu0 0
        %865 = vmatprep.subr.bf16.mxu0 0
        %866 = vmatpush1.bf16.msra.mxu0 0
        %867 = vmatprep.subr.bf16.mxu0 0
        %868 = vmatpush1.bf16.msra.mxu0 0
        %869 = vmatprep.subr.bf16.mxu0 0
        %870 = vmatpush1.bf16.msra.mxu0 0
        %871 = vmatprep.subr.bf16.mxu0 0
        %872 = vmatpush1.bf16.msra.mxu0 0
        %873 = vmatprep.subr.bf16.mxu0 0
        %874 = vmatpush1.bf16.msra.mxu0 0
        %875 = vmatprep.subr.bf16.mxu0 0
        %876 = vmatpush1.bf16.msra.mxu0 0
        %877 = vmatprep.subr.bf16.mxu0 0
        %878 = vmatpush1.bf16.msra.mxu0 0
        %879 = vmatprep.subr.bf16.mxu0 0
        %880 = vmatpush1.bf16.msra.mxu0 0
        %881 = vmatprep.subr.bf16.mxu0 0
        %882 = vmatpush1.bf16.msra.mxu0 0
        %883 = vmatprep.subr.bf16.mxu0 0
        %884 = vmatpush1.bf16.msra.mxu0 0
        %885 = vmatprep.mubr.bf16.mxu0 0
        %886 = vmatmul.mubr.bf16.gmra.mrb[0].mxu0 %v848
        %v887 = vpop.f32.mrb[0].mxu0
        %v888 = vadd.f32 %v842, %v887
        %v889 = vpop.f32.mrb[0].mxu0
        %v890 = vpop.f32.mrb[0].mxu0
        %v891 = vpop.f32.mrb[0].mxu0
        %892 = vdwg.mxu0
        %893 = vrot.lane.b32.xlu0 %v571, 112
        %v894 = vpop.permute.xlu0 %893
        %895 = vrot.lane.b32.xlu0 %v571, 80
        %v896 = vpop.permute.xlu0 %895
        %v898 = vsel %vm579, %v894, 0
        %v901 = vsel %vm579, %v896, 0
        %903 = vmatprep.subr.bf16.mxu0 0
        %904 = vmatpush1.bf16.xpose.msra.mxu0 %v901
        %905 = vmatprep.subr.bf16.mxu0 0
        %906 = vmatpush1.bf16.xpose.msra.mxu0 0
        %907 = vmatprep.subr.bf16.mxu0 0
        %908 = vmatpush1.bf16.xpose.msra.mxu0 0
        %909 = vmatprep.subr.bf16.mxu0 0
        %910 = vmatpush1.bf16.xpose.msra.mxu0 0
        %911 = vmatprep.subr.bf16.mxu0 0
        %912 = vmatpush1.bf16.xpose.msra.mxu0 0
        %913 = vmatprep.subr.bf16.mxu0 0
        %914 = vmatpush1.bf16.xpose.msra.mxu0 0
        %915 = vmatprep.subr.bf16.mxu0 0
        %916 = vmatpush1.bf16.xpose.msra.mxu0 0
        %917 = vmatprep.subr.bf16.mxu0 0
        %918 = vmatpush1.bf16.xpose.msra.mxu0 0
        %919 = vmatprep.subr.bf16.mxu0 0
        %920 = vmatpush1.bf16.xpose.msra.mxu0 0
        %921 = vmatprep.subr.bf16.mxu0 0
        %922 = vmatpush1.bf16.xpose.msra.mxu0 0
        %923 = vmatprep.subr.bf16.mxu0 0
        %924 = vmatpush1.bf16.xpose.msra.mxu0 0
        %925 = vmatprep.subr.bf16.mxu0 0
        %926 = vmatpush1.bf16.xpose.msra.mxu0 0
        %927 = vmatprep.subr.bf16.mxu0 0
        %928 = vmatpush1.bf16.xpose.msra.mxu0 0
        %929 = vmatprep.subr.bf16.mxu0 0
        %930 = vmatpush1.bf16.xpose.msra.mxu0 0
        %931 = vmatprep.subr.bf16.mxu0 0
        %932 = vmatpush1.bf16.xpose.msra.mxu0 0
        %933 = vmatprep.subr.bf16.mxu0 0
        %934 = vmatpush1.bf16.xpose.msra.mxu0 0
        %935 = vmatprep.mubr.bf16.mxu0 0
        %936 = vmatmul.mubr.bf16.gmra.mrb[0].mxu0 %v898
        %v937 = vpop.f32.mrb[0].mxu0
        %v938 = vadd.f32 0.0, %v937
        %v939 = vpop.f32.mrb[0].mxu0
        %v940 = vpop.f32.mrb[0].mxu0
        %v941 = vpop.f32.mrb[0].mxu0
        %942 = vdwg.mxu0
        %v943 = vsel %vm480, %v938, -1e+30
        %v944 = vsel %vm579, %v943, -inf
        %945 = vmax.xlane.f32.xlu0 %v944
        %v946 = vpop.xlane.xlu0 %945
        %v947 = vsub.f32 %v943, %v946
        %v948 = vmul.f32 %v947, 1.442695
        %v949 = vpow.pop %v948
        %v950 = vsel %vm579, %v949, 0.0
        %951 = vadd.xlane.f32.xlu0 %v950
        %v952 = vpop.xlane.xlu0 %951
        %v953 = vrcp.pop %v952
        %v954 = vmul.f32 %v949, %v953
        %v955 = vpack.c.bf16 %v954, %v954
        %956 = vrot.lane.b32.xlu0 %v571, 48
        %v957 = vpop.permute.xlu0 %956
        %v959 = vsel %vm579, %v955, 0
        %v962 = vsel %vm644, %v957, 0
        %964 = vmatprep.subr.bf16.mxu0 0
        %965 = vmatpush1.bf16.msra.mxu0 %v962
        %966 = vmatprep.subr.bf16.mxu0 0
        %967 = vmatpush1.bf16.msra.mxu0 0
        %968 = vmatprep.subr.bf16.mxu0 0
        %969 = vmatpush1.bf16.msra.mxu0 0
        %970 = vmatprep.subr.bf16.mxu0 0
        %971 = vmatpush1.bf16.msra.mxu0 0
        %972 = vmatprep.subr.bf16.mxu0 0
        %973 = vmatpush1.bf16.msra.mxu0 0
        %974 = vmatprep.subr.bf16.mxu0 0
        %975 = vmatpush1.bf16.msra.mxu0 0
        %976 = vmatprep.subr.bf16.mxu0 0
        %977 = vmatpush1.bf16.msra.mxu0 0
        %978 = vmatprep.subr.bf16.mxu0 0
        %979 = vmatpush1.bf16.msra.mxu0 0
        %980 = vmatprep.subr.bf16.mxu0 0
        %981 = vmatpush1.bf16.msra.mxu0 0
        %982 = vmatprep.subr.bf16.mxu0 0
        %983 = vmatpush1.bf16.msra.mxu0 0
        %984 = vmatprep.subr.bf16.mxu0 0
        %985 = vmatpush1.bf16.msra.mxu0 0
        %986 = vmatprep.subr.bf16.mxu0 0
        %987 = vmatpush1.bf16.msra.mxu0 0
        %988 = vmatprep.subr.bf16.mxu0 0
        %989 = vmatpush1.bf16.msra.mxu0 0
        %990 = vmatprep.subr.bf16.mxu0 0
        %991 = vmatpush1.bf16.msra.mxu0 0
        %992 = vmatprep.subr.bf16.mxu0 0
        %993 = vmatpush1.bf16.msra.mxu0 0
        %994 = vmatprep.subr.bf16.mxu0 0
        %995 = vmatpush1.bf16.msra.mxu0 0
        %996 = vmatprep.mubr.bf16.mxu0 0
        %997 = vmatmul.mubr.bf16.gmra.mrb[0].mxu0 %v959
        %v998 = vpop.f32.mrb[0].mxu0
        %v999 = vadd.f32 0.0, %v998
        %v1000 = vpop.f32.mrb[0].mxu0
        %v1001 = vpop.f32.mrb[0].mxu0
        %v1002 = vpop.f32.mrb[0].mxu0
        %1003 = vdwg.mxu0
        %v1004 = vpack.c.bf16 %v999, %v999
        %v1006 = vsel %vm579, %v1004, 0
        %v1009 = vsel %vm644, %v574, 0
        %1011 = vmatprep.subr.bf16.mxu0 0
        %1012 = vmatpush1.bf16.msra.mxu0 %v1009
        %1013 = vmatprep.subr.bf16.mxu0 0
        %1014 = vmatpush1.bf16.msra.mxu0 0
        %1015 = vmatprep.subr.bf16.mxu0 0
        %1016 = vmatpush1.bf16.msra.mxu0 0
        %1017 = vmatprep.subr.bf16.mxu0 0
        %1018 = vmatpush1.bf16.msra.mxu0 0
        %1019 = vmatprep.subr.bf16.mxu0 0
        %1020 = vmatpush1.bf16.msra.mxu0 0
        %1021 = vmatprep.subr.bf16.mxu0 0
        %1022 = vmatpush1.bf16.msra.mxu0 0
        %1023 = vmatprep.subr.bf16.mxu0 0
        %1024 = vmatpush1.bf16.msra.mxu0 0
        %1025 = vmatprep.subr.bf16.mxu0 0
        %1026 = vmatpush1.bf16.msra.mxu0 0
        %1027 = vmatprep.subr.bf16.mxu0 0
        %1028 = vmatpush1.bf16.msra.mxu0 0
        %1029 = vmatprep.subr.bf16.mxu0 0
        %1030 = vmatpush1.bf16.msra.mxu0 0
        %1031 = vmatprep.subr.bf16.mxu0 0
        %1032 = vmatpush1.bf16.msra.mxu0 0
        %1033 = vmatprep.subr.bf16.mxu0 0
        %1034 = vmatpush1.bf16.msra.mxu0 0
        %1035 = vmatprep.subr.bf16.mxu0 0
        %1036 = vmatpush1.bf16.msra.mxu0 0
        %1037 = vmatprep.subr.bf16.mxu0 0
        %1038 = vmatpush1.bf16.msra.mxu0 0
        %1039 = vmatprep.subr.bf16.mxu0 0
        %1040 = vmatpush1.bf16.msra.mxu0 0
        %1041 = vmatprep.subr.bf16.mxu0 0
        %1042 = vmatpush1.bf16.msra.mxu0 0
        %1043 = vmatprep.mubr.bf16.mxu0 0
        %1044 = vmatmul.mubr.bf16.gmra.mrb[0].mxu0 %v1006
        %v1045 = vpop.f32.mrb[0].mxu0
        %v1046 = vadd.f32 0.0, %v1045
        %v1047 = vpop.f32.mrb[0].mxu0
        %v1048 = vpop.f32.mrb[0].mxu0
        %v1049 = vpop.f32.mrb[0].mxu0
        %1050 = vdwg.mxu0
        %v1051 = vadd.f32 %v888, %v1046
        %1052 = vrot.lane.b32.xlu0 %v571, 104
        %v1053 = vpop.permute.xlu0 %1052
        %1054 = vrot.lane.b32.xlu0 %v571, 72
        %v1055 = vpop.permute.xlu0 %1054
        %v1057 = vsel %vm579, %v1053, 0
        %v1060 = vsel %vm579, %v1055, 0
        %1062 = vmatprep.subr.bf16.mxu0 0
        %1063 = vmatpush1.bf16.xpose.msra.mxu0 %v1060
        %1064 = vmatprep.subr.bf16.mxu0 0
        %1065 = vmatpush1.bf16.xpose.msra.mxu0 0
        %1066 = vmatprep.subr.bf16.mxu0 0
        %1067 = vmatpush1.bf16.xpose.msra.mxu0 0
        %1068 = vmatprep.subr.bf16.mxu0 0
        %1069 = vmatpush1.bf16.xpose.msra.mxu0 0
        %1070 = vmatprep.subr.bf16.mxu0 0
        %1071 = vmatpush1.bf16.xpose.msra.mxu0 0
        %1072 = vmatprep.subr.bf16.mxu0 0
        %1073 = vmatpush1.bf16.xpose.msra.mxu0 0
        %1074 = vmatprep.subr.bf16.mxu0 0
        %1075 = vmatpush1.bf16.xpose.msra.mxu0 0
        %1076 = vmatprep.subr.bf16.mxu0 0
        %1077 = vmatpush1.bf16.xpose.msra.mxu0 0
        %1078 = vmatprep.subr.bf16.mxu0 0
        %1079 = vmatpush1.bf16.xpose.msra.mxu0 0
        %1080 = vmatprep.subr.bf16.mxu0 0
        %1081 = vmatpush1.bf16.xpose.msra.mxu0 0
        %1082 = vmatprep.subr.bf16.mxu0 0
        %1083 = vmatpush1.bf16.xpose.msra.mxu0 0
        %1084 = vmatprep.subr.bf16.mxu0 0
        %1085 = vmatpush1.bf16.xpose.msra.mxu0 0
        %1086 = vmatprep.subr.bf16.mxu0 0
        %1087 = vmatpush1.bf16.xpose.msra.mxu0 0
        %1088 = vmatprep.subr.bf16.mxu0 0
        %1089 = vmatpush1.bf16.xpose.msra.mxu0 0
        %1090 = vmatprep.subr.bf16.mxu0 0
        %1091 = vmatpush1.bf16.xpose.msra.mxu0 0
        %1092 = vmatprep.subr.bf16.mxu0 0
        %1093 = vmatpush1.bf16.xpose.msra.mxu0 0
        %1094 = vmatprep.mubr.bf16.mxu0 0
        %1095 = vmatmul.mubr.bf16.gmra.mrb[0].mxu0 %v1057
        %v1096 = vpop.f32.mrb[0].mxu0
        %v1097 = vadd.f32 0.0, %v1096
        %v1098 = vpop.f32.mrb[0].mxu0
        %v1099 = vpop.f32.mrb[0].mxu0
        %v1100 = vpop.f32.mrb[0].mxu0
        %1101 = vdwg.mxu0
        %v1102 = vsel %vm480, %v1097, -1e+30
        %v1103 = vsel %vm579, %v1102, -inf
        %1104 = vmax.xlane.f32.xlu0 %v1103
        %v1105 = vpop.xlane.xlu0 %1104
        %v1106 = vsub.f32 %v1102, %v1105
        %v1107 = vmul.f32 %v1106, 1.442695
        %v1108 = vpow.pop %v1107
        %v1109 = vsel %vm579, %v1108, 0.0
        %1110 = vadd.xlane.f32.xlu0 %v1109
        %v1111 = vpop.xlane.xlu0 %1110
        %v1112 = vrcp.pop %v1111
        %v1113 = vmul.f32 %v1108, %v1112
        %v1114 = vpack.c.bf16 %v1113, %v1113
        %1115 = vrot.lane.b32.xlu0 %v571, 40
        %v1116 = vpop.permute.xlu0 %1115
        %v1118 = vsel %vm579, %v1114, 0
        %v1121 = vsel %vm644, %v1116, 0
        %1123 = vmatprep.subr.bf16.mxu0 0
        %1124 = vmatpush1.bf16.msra.mxu0 %v1121
        %1125 = vmatprep.subr.bf16.mxu0 0
        %1126 = vmatpush1.bf16.msra.mxu0 0
        %1127 = vmatprep.subr.bf16.mxu0 0
        %1128 = vmatpush1.bf16.msra.mxu0 0
        %1129 = vmatprep.subr.bf16.mxu0 0
        %1130 = vmatpush1.bf16.msra.mxu0 0
        %1131 = vmatprep.subr.bf16.mxu0 0
        %1132 = vmatpush1.bf16.msra.mxu0 0
        %1133 = vmatprep.subr.bf16.mxu0 0
        %1134 = vmatpush1.bf16.msra.mxu0 0
        %1135 = vmatprep.subr.bf16.mxu0 0
        %1136 = vmatpush1.bf16.msra.mxu0 0
        %1137 = vmatprep.subr.bf16.mxu0 0
        %1138 = vmatpush1.bf16.msra.mxu0 0
        %1139 = vmatprep.subr.bf16.mxu0 0
        %1140 = vmatpush1.bf16.msra.mxu0 0
        %1141 = vmatprep.subr.bf16.mxu0 0
        %1142 = vmatpush1.bf16.msra.mxu0 0
        %1143 = vmatprep.subr.bf16.mxu0 0
        %1144 = vmatpush1.bf16.msra.mxu0 0
        %1145 = vmatprep.subr.bf16.mxu0 0
        %1146 = vmatpush1.bf16.msra.mxu0 0
        %1147 = vmatprep.subr.bf16.mxu0 0
        %1148 = vmatpush1.bf16.msra.mxu0 0
        %1149 = vmatprep.subr.bf16.mxu0 0
        %1150 = vmatpush1.bf16.msra.mxu0 0
        %1151 = vmatprep.subr.bf16.mxu0 0
        %1152 = vmatpush1.bf16.msra.mxu0 0
        %1153 = vmatprep.subr.bf16.mxu0 0
        %1154 = vmatpush1.bf16.msra.mxu0 0
        %1155 = vmatprep.mubr.bf16.mxu0 0
        %1156 = vmatmul.mubr.bf16.gmra.mrb[0].mxu0 %v1118
        %v1157 = vpop.f32.mrb[0].mxu0
        %v1158 = vadd.f32 0.0, %v1157
        %v1159 = vpop.f32.mrb[0].mxu0
        %v1160 = vpop.f32.mrb[0].mxu0
        %v1161 = vpop.f32.mrb[0].mxu0
        %1162 = vdwg.mxu0
        %v1163 = vpack.c.bf16 %v1158, %v1158
        %v1165 = vsel %vm579, %v1163, 0
        %v1168 = vsel %vm644, %v575, 0
        %1170 = vmatprep.subr.bf16.mxu0 0
        %1171 = vmatpush1.bf16.msra.mxu0 %v1168
        %1172 = vmatprep.subr.bf16.mxu0 0
        %1173 = vmatpush1.bf16.msra.mxu0 0
        %1174 = vmatprep.subr.bf16.mxu0 0
        %1175 = vmatpush1.bf16.msra.mxu0 0
        %1176 = vmatprep.subr.bf16.mxu0 0
        %1177 = vmatpush1.bf16.msra.mxu0 0
        %1178 = vmatprep.subr.bf16.mxu0 0
        %1179 = vmatpush1.bf16.msra.mxu0 0
        %1180 = vmatprep.subr.bf16.mxu0 0
        %1181 = vmatpush1.bf16.msra.mxu0 0
        %1182 = vmatprep.subr.bf16.mxu0 0
        %1183 = vmatpush1.bf16.msra.mxu0 0
        %1184 = vmatprep.subr.bf16.mxu0 0
        %1185 = vmatpush1.bf16.msra.mxu0 0
        %1186 = vmatprep.subr.bf16.mxu0 0
        %1187 = vmatpush1.bf16.msra.mxu0 0
        %1188 = vmatprep.subr.bf16.mxu0 0
        %1189 = vmatpush1.bf16.msra.mxu0 0
        %1190 = vmatprep.subr.bf16.mxu0 0
        %1191 = vmatpush1.bf16.msra.mxu0 0
        %1192 = vmatprep.subr.bf16.mxu0 0
        %1193 = vmatpush1.bf16.msra.mxu0 0
        %1194 = vmatprep.subr.bf16.mxu0 0
        %1195 = vmatpush1.bf16.msra.mxu0 0
        %1196 = vmatprep.subr.bf16.mxu0 0
        %1197 = vmatpush1.bf16.msra.mxu0 0
        %1198 = vmatprep.subr.bf16.mxu0 0
        %1199 = vmatpush1.bf16.msra.mxu0 0
        %1200 = vmatprep.subr.bf16.mxu0 0
        %1201 = vmatpush1.bf16.msra.mxu0 0
        %1202 = vmatprep.mubr.bf16.mxu0 0
        %1203 = vmatmul.mubr.bf16.gmra.mrb[0].mxu0 %v1165
        %v1204 = vpop.f32.mrb[0].mxu0
        %v1205 = vadd.f32 0.0, %v1204
        %v1206 = vpop.f32.mrb[0].mxu0
        %v1207 = vpop.f32.mrb[0].mxu0
        %v1208 = vpop.f32.mrb[0].mxu0
        %1209 = vdwg.mxu0
        %v1210 = vadd.f32 %v1051, %v1205
        %v1211 = vadd.f32 %v473, %v1210
        %v1212 = vlaneseq
        %v1213 = vshrl.u32 %v1212, 7
        %v1214 = vsub.s32 3, %v1213
        %v1215 = vrot.slane %v481, %v1214
        %v1216 = vadd.f32 %v1211, %v1215
        %v1217 = vsel %vm482, %v1216, 0.0
        %1218 = vadd.xlane.f32.xlu0 %v1217
        %v1219 = vpop.xlane.xlu0 %1218
        %v1220 = vmul.f32 %v1219, %v486
        %v1221 = vsub.f32 %v1216, %v1220
        %v1222 = vmul.f32 %v1221, %v1221
        %v1223 = vsel %vm482, %v1222, 0.0
        %1224 = vadd.xlane.f32.xlu0 %v1223
        %v1225 = vpop.xlane.xlu0 %1224
        %v1226 = vmul.f32 %v1225, %v486
        %v1227 = vadd.f32 %v1226, 1e-06
        %v1228 = vrsqrt.pop %v1227
        %v1229 = vmul.f32 %v1221, %v1228
        %v1230 = vlaneseq
        %v1231 = vshrl.u32 %v1230, 7
        %v1232 = vsub.s32 4, %v1231
        %v1233 = vrot.slane %v481, %v1232
        %v1234 = vmul.f32 %v1229, %v1233
        %v1235 = vlaneseq
        %v1236 = vshrl.u32 %v1235, 7
        %v1237 = vsub.s32 5, %v1236
        %v1238 = vrot.slane %v481, %v1237
        %v1239 = vadd.f32 %v1234, %v1238
        %v1240 = vpack.c.bf16 %v1239, %v1239
        %v1241 = vld [vmem:[%s5] sm:$0xf]
        %v1242 = vld [vmem:[%s5 + $0x4] sm:$0xf]
        %v1243 = vld [vmem:[%s5 + $0x8] sm:$0xf]
        %v1244 = vld [vmem:[%s5 + $0xc] sm:$0xf]
        %v1245 = vlaneseq
        %v1246 = vshrl.u32 %v1245, 7
        %v1247 = vsub.s32 6, %v1246
        %v1248 = vrot.slane %v481, %v1247
        %v1253 = vunpack.c.l.b16 %v1241
        %v1254 = vunpack.c.l.b16 %v1242
        %v1255 = vunpack.c.l.b16 %v1243
        %v1256 = vunpack.c.l.b16 %v1244
        %v1257 = vpack.c.b16 %v1254, %v1253
        %v1258 = vpack.c.b16 %v1256, %v1255
        %v1262 = vsel %vm482, %v1240, 0
        %1264 = vmatprep.subr.bf16.mxu0 0
        %1265 = vmatpush1.bf16.msra.mxu0 %v1257
        %1266 = vmatprep.subr.bf16.mxu0 0
        %1267 = vmatpush1.bf16.msra.mxu0 %v1258
        %1268 = vmatprep.subr.bf16.mxu0 0
        %1269 = vmatpush1.bf16.msra.mxu0 0
        %1270 = vmatprep.subr.bf16.mxu0 0
        %1271 = vmatpush1.bf16.msra.mxu0 0
        %1272 = vmatprep.subr.bf16.mxu0 0
        %1273 = vmatpush1.bf16.msra.mxu0 0
        %1274 = vmatprep.subr.bf16.mxu0 0
        %1275 = vmatpush1.bf16.msra.mxu0 0
        %1276 = vmatprep.subr.bf16.mxu0 0
        %1277 = vmatpush1.bf16.msra.mxu0 0
        %1278 = vmatprep.subr.bf16.mxu0 0
        %1279 = vmatpush1.bf16.msra.mxu0 0
        %1280 = vmatprep.subr.bf16.mxu0 0
        %1281 = vmatpush1.bf16.msra.mxu0 0
        %1282 = vmatprep.subr.bf16.mxu0 0
        %1283 = vmatpush1.bf16.msra.mxu0 0
        %1284 = vmatprep.subr.bf16.mxu0 0
        %1285 = vmatpush1.bf16.msra.mxu0 0
        %1286 = vmatprep.subr.bf16.mxu0 0
        %1287 = vmatpush1.bf16.msra.mxu0 0
        %1288 = vmatprep.subr.bf16.mxu0 0
        %1289 = vmatpush1.bf16.msra.mxu0 0
        %1290 = vmatprep.subr.bf16.mxu0 0
        %1291 = vmatpush1.bf16.msra.mxu0 0
        %1292 = vmatprep.subr.bf16.mxu0 0
        %1293 = vmatpush1.bf16.msra.mxu0 0
        %1294 = vmatprep.subr.bf16.mxu0 0
        %1295 = vmatpush1.bf16.msra.mxu0 0
        %1296 = vmatprep.mubr.bf16.mxu0 0
        %1297 = vmatmul.mubr.bf16.gmra.mrb[0].mxu0 %v1262
        %v1298 = vpop.f32.mrb[0].mxu0
        %v1299 = vadd.f32 %v1248, %v1298
        %v1300 = vpop.f32.mrb[0].mxu0
        %v1301 = vpop.f32.mrb[0].mxu0
        %v1302 = vpop.f32.mrb[0].mxu0
        %1303 = vdwg.mxu0
        %v1304 = vmul.f32 %v1299, 0.5
        %v1305 = vmul.f32 %v1299, 0.044715
        %v1306 = vmul.f32 %v1305, %v1299
        %v1307 = vmul.f32 %v1306, %v1299
        %v1308 = vadd.f32 %v1299, %v1307
        %v1309 = vmul.f32 %v1308, 0.7978846
        %v1310 = vtanh.pop %v1309
        %v1311 = vadd.f32 %v1310, 1.0
        %v1312 = vmul.f32 %v1304, %v1311
        %v1313 = vpack.c.bf16 %v1312, %v1312
        %v1314 = vld [vmem:[%s6] sm:$0xf]
        %v1315 = vld [vmem:[%s6 + $0x4] sm:$0xf]
        %v1316 = vld [vmem:[%s6 + $0x8] sm:$0xf]
        %v1317 = vld [vmem:[%s6 + $0xc] sm:$0xf]
        %v1318 = vld [vmem:[%s6 + $0x10] sm:$0xf]
        %v1319 = vld [vmem:[%s6 + $0x14] sm:$0xf]
        %v1320 = vld [vmem:[%s6 + $0x18] sm:$0xf]
        %v1321 = vld [vmem:[%s6 + $0x1c] sm:$0xf]
        %v1322 = vlaneseq
        %v1323 = vshrl.u32 %v1322, 7
        %v1324 = vsub.s32 7, %v1323
        %v1325 = vrot.slane %v481, %v1324
        %v1334 = vunpack.c.l.b16 %v1314
        %v1335 = vunpack.c.l.b16 %v1315
        %v1336 = vunpack.c.l.b16 %v1316
        %v1337 = vunpack.c.l.b16 %v1317
        %v1338 = vunpack.c.l.b16 %v1318
        %v1339 = vunpack.c.l.b16 %v1319
        %v1340 = vunpack.c.l.b16 %v1320
        %v1341 = vunpack.c.l.b16 %v1321
        %v1342 = vpack.c.b16 %v1335, %v1334
        %v1343 = vpack.c.b16 %v1337, %v1336
        %v1344 = vpack.c.b16 %v1339, %v1338
        %v1345 = vpack.c.b16 %v1341, %v1340
        %vm1350 = vcmask 523264
        %v1352 = vsel %vm1350, %v1313, 0
        %1354 = vmatprep.subr.bf16.mxu0 0
        %1355 = vmatpush1.bf16.msra.mxu0 %v1342
        %1356 = vmatprep.subr.bf16.mxu0 0
        %1357 = vmatpush1.bf16.msra.mxu0 %v1343
        %1358 = vmatprep.subr.bf16.mxu0 0
        %1359 = vmatpush1.bf16.msra.mxu0 %v1344
        %1360 = vmatprep.subr.bf16.mxu0 0
        %1361 = vmatpush1.bf16.msra.mxu0 %v1345
        %1362 = vmatprep.subr.bf16.mxu0 0
        %1363 = vmatpush1.bf16.msra.mxu0 0
        %1364 = vmatprep.subr.bf16.mxu0 0
        %1365 = vmatpush1.bf16.msra.mxu0 0
        %1366 = vmatprep.subr.bf16.mxu0 0
        %1367 = vmatpush1.bf16.msra.mxu0 0
        %1368 = vmatprep.subr.bf16.mxu0 0
        %1369 = vmatpush1.bf16.msra.mxu0 0
        %1370 = vmatprep.subr.bf16.mxu0 0
        %1371 = vmatpush1.bf16.msra.mxu0 0
        %1372 = vmatprep.subr.bf16.mxu0 0
        %1373 = vmatpush1.bf16.msra.mxu0 0
        %1374 = vmatprep.subr.bf16.mxu0 0
        %1375 = vmatpush1.bf16.msra.mxu0 0
        %1376 = vmatprep.subr.bf16.mxu0 0
        %1377 = vmatpush1.bf16.msra.mxu0 0
        %1378 = vmatprep.subr.bf16.mxu0 0
        %1379 = vmatpush1.bf16.msra.mxu0 0
        %1380 = vmatprep.subr.bf16.mxu0 0
        %1381 = vmatpush1.bf16.msra.mxu0 0
        %1382 = vmatprep.subr.bf16.mxu0 0
        %1383 = vmatpush1.bf16.msra.mxu0 0
        %1384 = vmatprep.subr.bf16.mxu0 0
        %1385 = vmatpush1.bf16.msra.mxu0 0
        %1386 = vmatprep.mubr.bf16.mxu0 0
        %1387 = vmatmul.mubr.bf16.gmra.mrb[0].mxu0 %v1352
        %v1388 = vpop.f32.mrb[0].mxu0
        %v1389 = vadd.f32 %v1325, %v1388
        %v1390 = vpop.f32.mrb[0].mxu0
        %v1391 = vpop.f32.mrb[0].mxu0
        %v1392 = vpop.f32.mrb[0].mxu0
        %1393 = vdwg.mxu0
        %v1394 = vadd.f32 %v1216, %v1389
        %vm1395 = vcmask 258049
        %1396 = vst.msk [vmem:[%s298 - $0x1] sm:$0x1e] %vm1395, %v1394
        %s1397 = sand.u32 %s203, 1
        %s1398 = scalar_lea.sflag [#allocation3], %s1397
        %s1399 = sand.u32 %s203, 1
        %s1400 = smul.addr %s1399, 4
        %s1401 = scalar_lea.vmem [#allocation2], %s1400
        // Predicated region
        $region53: #{encoder_forward.1} parent=51 // pred_check
          %p1402 = pneg %p213
        $region54: #{encoder_forward.1} parent=51 // pred_check_branch
          %1404 = sbr.rel (%p1402) target = $region56
        $region55: #{encoder_forward.1} parent=51 // pred_region
          %s1406 = ssub.s32 64, 64
          %1407 = vsyncadd %s1398, %s1406
          %s1408 = smul.addr %s22, 64
          %s1409 = scalar_lea.hbm %s8, %s1408
          %s1411 = sshll.u32 %s1401, 4
          %s1412 = int_to_ptr.vmem [resolvable:$true] %s1411
          %1414 = dma.vmem_to_hbm [thread:$0]  %s1412, 64, %s1409, %s1398
        $region56: #{encoder_forward.1} parent=51 // pred_fallthru
          _
      $region52: #{encoder_forward.1} parent=5 // pred_fallthru
        _
      %p1415 = scmp.le.s32.totalorder 2, %s17
      // Predicated region
      $region57: #{encoder_forward.1} parent=5 // pred_check
        %p1416 = pneg %p1415
      $region58: #{encoder_forward.1} parent=5 // pred_check_branch
        %1418 = sbr.rel (%p1416) target = $region60
      $region59: #{encoder_forward.1} parent=5 // pred_region
        %s1419 = ssub.s32 %s17, 2
        // Predicated region
        $region61: #{encoder_forward.1} parent=59 // pred_check
          %p1420 = pneg %p219
        $region62: #{encoder_forward.1} parent=59 // pred_check_branch
          %1422 = sbr.rel (%p1420) target = $region64
        $region63: #{encoder_forward.1} parent=59 // pred_region
          %s1423 = sand.u32 %s204, 1
          %s1424 = scalar_lea.sflag [#allocation3], %s1423
          %s1425 = sand.u32 %s204, 1
          %s1426 = smul.addr %s1425, 4
          %s1427 = scalar_lea.vmem [#allocation2], %s1426
          %1428 = dma.done %s1424, 64
        $region64: #{encoder_forward.1} parent=59 // pred_fallthru
          _
      $region60: #{encoder_forward.1} parent=5 // pred_fallthru
        _
    $region6: #{encoder_forward.1} parent=1 // loop_footer
      %s21 = sadd.s32 1, %s17
    $region7: #{encoder_forward.1} parent=1 // loop_footer_branch
      %16 = sbr.rel target = $region3
    $region8: #{encoder_forward.1} parent=1 // loop_exit
      _
    %1429 = vsyncpa [#allocation3], 1
    %s1430 = scalar_lea.sflag [#allocation3], 1
    %1431 = vsyncpa %s1430, 1

</llo_original>
